<compile_context>
chip_gen: v7x
topology: tpu7x:2x2x1
jax: 0.10.0
libtpu: 0.0.40
codegen_flags: <defaults>
</compile_context>

<pallas_src>
import math
import numpy as np
import jax
import jax.numpy as jnp
from jax.experimental import pallas as pl
from jax.experimental.pallas import tpu as pltpu

_A = -0.75  # PyTorch bicubic coefficient


def _cubic1(t):
    # |t| <= 1 branch of the cubic convolution kernel
    return ((_A + 2.0) * t - (_A + 3.0)) * t * t + 1.0


def _cubic2(t):
    # 1 < |t| < 2 branch of the cubic convolution kernel
    return ((_A * t - 5.0 * _A) * t + 8.0 * _A) * t - 4.0 * _A


def bicubic_up2_matrix(n_in):
    """(2*n_in, n_in) matrix U so that U @ v equals PyTorch's
    F.interpolate(v, scale_factor=2, mode='bicubic', align_corners=False)
    along one axis (border indices clamped / replicated)."""
    n_out = 2 * n_in
    U = np.zeros((n_out, n_in), dtype=np.float64)
    for o in range(n_out):
        src = (o + 0.5) / 2.0 - 0.5
        i0 = math.floor(src)
        t = src - i0
        w = [_cubic2(t + 1.0), _cubic1(t), _cubic1(1.0 - t), _cubic2(2.0 - t)]
        for k in range(4):
            idx = min(max(i0 - 1 + k, 0), n_in - 1)
            U[o, idx] += w[k]
    return U


def _selectors(n):
    """Even / odd row-selector matrices of shape (n//2, n)."""
    se = np.zeros((n // 2, n), dtype=np.float64)
    so = np.zeros((n // 2, n), dtype=np.float64)
    se[np.arange(n // 2), 2 * np.arange(n // 2)] = 1.0
    so[np.arange(n // 2), 2 * np.arange(n // 2) + 1] = 1.0
    return se, so


def build_flat_operator(H, W):
    """Concatenated flattened operator KT of shape (H*W, 4*H*W) so that for a row-major
    flattened image x (H*W,):
        (x @ KT)[i*H*W:(i+1)*H*W] == 0.5 * flatten(bicubic_up2x(DWT_band_i(X)))
    Both the DWT /2 scale and the extra 0.5 sigmoid->tanh argument scale are folded in,
    so in-kernel   x * sigmoid(up_i) == 0.5*x*tanh(x @ KT_i) + 0.5*x."""
    Uh = bicubic_up2_matrix(H // 2)   # (H, H//2)
    Uw = bicubic_up2_matrix(W // 2)   # (W, W//2)
    se_h, so_h = _selectors(H)
    se_w, so_w = _selectors(W)
    # band order: LL, HL, LH, HH (same as the torch.cat in DWT)
    row_combo = [se_h + so_h, se_h + so_h, so_h - se_h, se_h - so_h]
    col_combo = [se_w + so_w, so_w - se_w, se_w + so_w, se_w - so_w]
    blocks = []
    for i in range(4):
        Mh = 0.25 * (Uh @ row_combo[i])    # 0.5 (DWT) * 0.5 (tanh-arg) folded in
        MwT = (Uw @ col_combo[i]).T        # (W, W)
        # KT_i[h*W+w, o*W+p] = Mh[o,h] * MwT[w,p]  ==  kron(Mh^T, MwT)
        blocks.append(np.kron(Mh.T, MwT))  # (H*W, H*W)
    return np.concatenate(blocks, axis=1)  # (H*W, 4*H*W) float64


def wavelet_attention_kernel(x_ref, kt_ref, o_ref):
    # x_ref : (TB*C_pad, HW) f32     TB batches x C_pad channels, flattened spatial
    # kt_ref: (HW, 4*HW)             concatenated per-band operators (scales folded in)
    # o_ref : (TB, 4, C_pad, HW) f32 band-major gated output
    tb, _, c_pad, hw = o_ref.shape
    x = x_ref[...]                          # f32 (TM, HW)
    half_x = 0.5 * x                        # shared across the 4 bands
    xb = x.astype(kt_ref.dtype)             # bf16 (or f32) MXU operand
    for i in range(4):                      # static unroll over bands
        u = jnp.dot(xb, kt_ref[:, i * hw:(i + 1) * hw],
                    preferred_element_type=jnp.float32)       # (TM, HW) f32 accumulation
        res = half_x * jnp.tanh(u) + half_x                   # == x * sigmoid(up_band)
        for b in range(tb):                 # static unroll, TB is small
            o_ref[b, i] = res[b * c_pad:(b + 1) * c_pad, :]   # sublane-full, lane-dense


def _vmem_limit_bytes():
    """Generation-aware VMEM scoped limit (~25% headroom)."""
    try:
        cap = int(pltpu.get_tpu_info().vmem_capacity_bytes)
    except Exception:
        cap = 64 * 1024 * 1024  # conservative: v7x per-TensorCore VMEM
    return max(cap * 3 // 4, 32 * 1024 * 1024)


def wavelet_attention(x, *, operand_dtype=jnp.bfloat16):
    """x: (B, C, H, W) float32 -> (B, 4*C, H, W) float32 (band-major, like torch)."""
    B, C, H, W = x.shape
    assert H % 2 == 0 and W % 2 == 0, "H and W must be even for the DWT"
    HW = H * W
    # TODO(synk): for large spatial sizes (H*W > 1024) the flattened (HW x 4*HW) operator
    # no longer fits VMEM comfortably; switch to the separable two-matmul
    # (Mh @ X @ MwT) form there.
    assert HW <= 1024, "flattened-operator path requires H*W <= 1024"
    # Note: HW a multiple of 128 keeps every load/store lane-dense (true for H=W>=16).

    KT = jnp.asarray(build_flat_operator(H, W), dtype=operand_dtype)  # (HW, 4*HW)

    # Pad channels to a multiple of 8 sublanes so all tiles / stores are sublane-full.
    C_pad = ((C + 7) // 8) * 8
    xf = x.reshape(B, C, HW).astype(jnp.float32)
    if C_pad != C:
        xf = jnp.pad(xf, ((0, 0), (0, C_pad - C), (0, 0)))
    xrows = xf.reshape(B * C_pad, HW)          # metadata-only reshape

    # Row-tile selection: TB batches per tile -> M = TB*C_pad rows feed the MXU.
    TM_TARGET = 256                            # full MXU width on v6e/v7x; fine on v5e
    max_tb = max(1, min(B, TM_TARGET // max(C_pad, 1)))
    if B >= 2:
        max_tb = min(max_tb, B // 2)           # keep >= 2 grid steps for v7x's 2 TCs
    max_tb = max(1, max_tb)
    TB = 1
    for cand in range(max_tb, 0, -1):
        if B % cand == 0:
            TB = cand
            break
    grid = (B // TB,)

    def _call(single_buffer_kt):
        if single_buffer_kt:
            kt_spec = pl.BlockSpec((HW, 4 * HW), lambda t: (0, 0),
                                   pipeline_mode=pl.Buffered(1))  # constant: 1 VMEM copy
        else:
            kt_spec = pl.BlockSpec((HW, 4 * HW), lambda t: (0, 0))
        return pl.pallas_call(
            wavelet_attention_kernel,
            out_shape=jax.ShapeDtypeStruct((B, 4, C_pad, HW), jnp.float32),
            grid=grid,
            in_specs=[
                pl.BlockSpec((TB * C_pad, HW), lambda t: (t, 0)),
                kt_spec,
            ],
            out_specs=pl.BlockSpec((TB, 4, C_pad, HW), lambda t: (t, 0, 0, 0)),
            compiler_params=pltpu.CompilerParams(
                dimension_semantics=("parallel",),
                vmem_limit_bytes=_vmem_limit_bytes(),
            ),
        )(xrows, KT)

    try:
        out = jax.block_until_ready(_call(True))
    except Exception:
        # TODO(synk): this JAX build rejected pl.Buffered(1) single-buffering of the
        # constant operator; fall back to the default (double-buffered) spec.
        out = jax.block_until_ready(_call(False))

    if C_pad != C:
        out = out[:, :, :C, :]
    # (B, 4, C, H*W) -> (B, 4*C, H, W): contiguous dim merge/split, no data movement.
    return out.reshape(B, 4 * C, H, W)


def reference_numpy(x):
    """Pure-numpy float64 reference mirroring the PyTorch forward pass."""
    B, C, H, W = x.shape
    x01 = x[:, :, 0::2, :] / 2.0
    x02 = x[:, :, 1::2, :] / 2.0
    x1 = x01[:, :, :, 0::2]
    x2 = x02[:, :, :, 0::2]
    x3 = x01[:, :, :, 1::2]
    x4 = x02[:, :, :, 1::2]
    bands = [x1 + x2 + x3 + x4, -x1 - x2 + x3 + x4,
             -x1 + x2 - x3 + x4, x1 - x2 - x3 + x4]
    Uh = bicubic_up2_matrix(H // 2)
    Uw = bicubic_up2_matrix(W // 2)
    outs = []
    for b in bands:
        up = np.einsum('oi,ncij,pj->ncop', Uh, b, Uw)
        outs.append(x * (1.0 / (1.0 + np.exp(-up))))
    return np.stack(outs, axis=1).reshape(B, 4 * C, H, W)


if __name__ == "__main__":
    key = jax.random.PRNGKey(0)
    B, C, H, W = 2, 4, 16, 16
    x = jax.random.normal(key, (B, C, H, W), dtype=jnp.float32)

    ref = reference_numpy(np.asarray(x, dtype=np.float64))

    # Fast path: bf16 MXU operands with f32 accumulation (gate math stays f32).
    out = jax.block_until_ready(wavelet_attention(x))
    assert out.shape == (B, 4 * C, H, W), out.shape
    err_bf16 = float(np.max(np.abs(np.asarray(out, dtype=np.float64) - ref)))
    assert err_bf16 < 5e-2, f"bf16-operand path max abs error too large: {err_bf16}"

    # Exactness check of the operator construction with f32 operands.
    out_f32 = jax.block_until_ready(wavelet_attention(x, operand_dtype=jnp.float32))
    err_f32 = float(np.max(np.abs(np.asarray(out_f32, dtype=np.float64) - ref)))
    assert err_f32 < 1e-4, f"f32 path max abs error too large: {err_f32}"

    print("KERNEL_OK")
</pallas_src>

<mosaic_0001>
module attributes {stable_mosaic.version = 11 : i64} {
  func.func @wavelet_attention_kernel(%arg0: i32, %arg1: memref<8x256xf32, #tpu.memory_space<vmem>>, %arg2: memref<256x1024xbf16, #tpu.memory_space<vmem>>, %arg3: memref<1x4x8x256xf32, #tpu.memory_space<vmem>>) attributes {dimension_semantics = [#tpu.dimension_semantics<parallel>], iteration_bounds = array<i64: 2>, scalar_prefetch = 0 : i64, scratch_operands = 0 : i64, tpu.core_type = #tpu.core_type<tc>, window_params = [{transform_indices = @transform_0, window_bounds = array<i64: 8, 256>}, {pipeline_mode = #tpu.pipeline_mode<synchronous>, transform_indices = @transform_1, window_bounds = array<i64: 256, 1024>}, {transform_indices = @transform_2, window_bounds = array<i64: 1, 4, 8, 256>}]} {
    %c0 = arith.constant 0 : index
    %c0_0 = arith.constant 0 : index
    %0 = vector.load %arg1[%c0, %c0_0] : memref<8x256xf32, #tpu.memory_space<vmem>>, vector<8x256xf32>
    %cst = arith.constant 5.000000e-01 : f32
    %1 = vector.broadcast %cst : f32 to vector<8x256xf32>
    %2 = arith.mulf %1, %0 : vector<8x256xf32>
    %3 = arith.truncf %0 : vector<8x256xf32> to vector<8x256xbf16>
    %c0_1 = arith.constant 0 : index
    %c0_2 = arith.constant 0 : index
    %4 = vector.load %arg2[%c0_1, %c0_2] : memref<256x1024xbf16, #tpu.memory_space<vmem>>, vector<256x256xbf16>
    %cst_3 = arith.constant dense<0.000000e+00> : vector<8x256xf32>
    %5 = tpu.matmul %3, %4, %cst_3 {dimension_numbers = #tpu.dot_dimension_numbers<[1], [0], [0], [1], [0, 0, 1, 1], [], []>} : vector<8x256xbf16>, vector<256x256xbf16>, vector<8x256xf32> -> vector<8x256xf32>
    %6 = math.tanh %5 : vector<8x256xf32>
    %7 = arith.mulf %2, %6 : vector<8x256xf32>
    %8 = arith.addf %7, %2 : vector<8x256xf32>
    %c0_4 = arith.constant 0 : index
    %c0_5 = arith.constant 0 : index
    %c0_6 = arith.constant 0 : index
    %c0_7 = arith.constant 0 : index
    %9 = vector.load %arg3[%c0_4, %c0_5, %c0_6, %c0_7] : memref<1x4x8x256xf32, #tpu.memory_space<vmem>>, vector<1x1x8x256xf32>
    %10 = vector.shape_cast %9 : vector<1x1x8x256xf32> to vector<8x256xf32>
    %11 = vector.shape_cast %8 : vector<8x256xf32> to vector<1x1x8x256xf32>
    tpu.vector_store %arg3[%c0_4, %c0_5, %c0_6, %c0_7], %11 {strides = array<i32>} : memref<1x4x8x256xf32, #tpu.memory_space<vmem>>, vector<1x1x8x256xf32>,
    %c0_8 = arith.constant 0 : index
    %c256 = arith.constant 256 : index
    %12 = vector.load %arg2[%c0_8, %c256] : memref<256x1024xbf16, #tpu.memory_space<vmem>>, vector<256x256xbf16>
    %cst_9 = arith.constant dense<0.000000e+00> : vector<8x256xf32>
    %13 = tpu.matmul %3, %12, %cst_9 {dimension_numbers = #tpu.dot_dimension_numbers<[1], [0], [0], [1], [0, 0, 1, 1], [], []>} : vector<8x256xbf16>, vector<256x256xbf16>, vector<8x256xf32> -> vector<8x256xf32>
    %14 = math.tanh %13 : vector<8x256xf32>
    %15 = arith.mulf %2, %14 : vector<8x256xf32>
    %16 = arith.addf %15, %2 : vector<8x256xf32>
    %c0_10 = arith.constant 0 : index
    %c1 = arith.constant 1 : index
    %c0_11 = arith.constant 0 : index
    %c0_12 = arith.constant 0 : index
    %17 = vector.load %arg3[%c0_10, %c1, %c0_11, %c0_12] : memref<1x4x8x256xf32, #tpu.memory_space<vmem>>, vector<1x1x8x256xf32>
    %18 = vector.shape_cast %17 : vector<1x1x8x256xf32> to vector<8x256xf32>
    %19 = vector.shape_cast %16 : vector<8x256xf32> to vector<1x1x8x256xf32>
    tpu.vector_store %arg3[%c0_10, %c1, %c0_11, %c0_12], %19 {strides = array<i32>} : memref<1x4x8x256xf32, #tpu.memory_space<vmem>>, vector<1x1x8x256xf32>,
    %c0_13 = arith.constant 0 : index
    %c512 = arith.constant 512 : index
    %20 = vector.load %arg2[%c0_13, %c512] : memref<256x1024xbf16, #tpu.memory_space<vmem>>, vector<256x256xbf16>
    %cst_14 = arith.constant dense<0.000000e+00> : vector<8x256xf32>
    %21 = tpu.matmul %3, %20, %cst_14 {dimension_numbers = #tpu.dot_dimension_numbers<[1], [0], [0], [1], [0, 0, 1, 1], [], []>} : vector<8x256xbf16>, vector<256x256xbf16>, vector<8x256xf32> -> vector<8x256xf32>
    %22 = math.tanh %21 : vector<8x256xf32>
    %23 = arith.mulf %2, %22 : vector<8x256xf32>
    %24 = arith.addf %23, %2 : vector<8x256xf32>
    %c0_15 = arith.constant 0 : index
    %c2 = arith.constant 2 : index
    %c0_16 = arith.constant 0 : index
    %c0_17 = arith.constant 0 : index
    %25 = vector.load %arg3[%c0_15, %c2, %c0_16, %c0_17] : memref<1x4x8x256xf32, #tpu.memory_space<vmem>>, vector<1x1x8x256xf32>
    %26 = vector.shape_cast %25 : vector<1x1x8x256xf32> to vector<8x256xf32>
    %27 = vector.shape_cast %24 : vector<8x256xf32> to vector<1x1x8x256xf32>
    tpu.vector_store %arg3[%c0_15, %c2, %c0_16, %c0_17], %27 {strides = array<i32>} : memref<1x4x8x256xf32, #tpu.memory_space<vmem>>, vector<1x1x8x256xf32>,
    %c0_18 = arith.constant 0 : index
    %c768 = arith.constant 768 : index
    %28 = vector.load %arg2[%c0_18, %c768] : memref<256x1024xbf16, #tpu.memory_space<vmem>>, vector<256x256xbf16>
    %cst_19 = arith.constant dense<0.000000e+00> : vector<8x256xf32>
    %29 = tpu.matmul %3, %28, %cst_19 {dimension_numbers = #tpu.dot_dimension_numbers<[1], [0], [0], [1], [0, 0, 1, 1], [], []>} : vector<8x256xbf16>, vector<256x256xbf16>, vector<8x256xf32> -> vector<8x256xf32>
    %30 = math.tanh %29 : vector<8x256xf32>
    %31 = arith.mulf %2, %30 : vector<8x256xf32>
    %32 = arith.addf %31, %2 : vector<8x256xf32>
    %c0_20 = arith.constant 0 : index
    %c3 = arith.constant 3 : index
    %c0_21 = arith.constant 0 : index
    %c0_22 = arith.constant 0 : index
    %33 = vector.load %arg3[%c0_20, %c3, %c0_21, %c0_22] : memref<1x4x8x256xf32, #tpu.memory_space<vmem>>, vector<1x1x8x256xf32>
    %34 = vector.shape_cast %33 : vector<1x1x8x256xf32> to vector<8x256xf32>
    %35 = vector.shape_cast %32 : vector<8x256xf32> to vector<1x1x8x256xf32>
    tpu.vector_store %arg3[%c0_20, %c3, %c0_21, %c0_22], %35 {strides = array<i32>} : memref<1x4x8x256xf32, #tpu.memory_space<vmem>>, vector<1x1x8x256xf32>,
    return
  }
  func.func @transform_0(%arg0: i32) -> (i32, i32) {
    %c0_i32 = arith.constant 0 : i32
    %c0_i32_0 = arith.constant 0 : i32
    return %arg0, %c0_i32 : i32, i32
  }
  func.func @transform_1(%arg0: i32) -> (i32, i32) {
    %c0_i32 = arith.constant 0 : i32
    %c0_i32_0 = arith.constant 0 : i32
    %c0_i32_1 = arith.constant 0 : i32
    return %c0_i32, %c0_i32_0 : i32, i32
  }
  func.func @transform_2(%arg0: i32) -> (i32, i32, i32, i32) {
    %c0_i32 = arith.constant 0 : i32
    %c0_i32_0 = arith.constant 0 : i32
    %c0_i32_1 = arith.constant 0 : i32
    %c0_i32_2 = arith.constant 0 : i32
    return %arg0, %c0_i32, %c0_i32_0, %c0_i32_1 : i32, i32, i32, i32
  }
}

module attributes {stable_mosaic.version = 11 : i64} {
  func.func @wavelet_attention_kernel(%arg0: i32, %arg1: memref<8x256xf32, #tpu.memory_space<vmem>>, %arg2: memref<256x1024xbf16, #tpu.memory_space<vmem>>, %arg3: memref<1x4x8x256xf32, #tpu.memory_space<vmem>>) attributes {dimension_semantics = [#tpu.dimension_semantics<parallel>], iteration_bounds = array<i64: 2>, scalar_prefetch = 0 : i64, scratch_operands = 0 : i64, tpu.core_type = #tpu.core_type<tc>, window_params = [{transform_indices = @transform_0, window_bounds = array<i64: 8, 256>}, {pipeline_mode = #tpu.pipeline_mode<synchronous>, transform_indices = @transform_1, window_bounds = array<i64: 256, 1024>}, {transform_indices = @transform_2, window_bounds = array<i64: 1, 4, 8, 256>}]} {
    %c0 = arith.constant 0 : index
    %c0_0 = arith.constant 0 : index
    %0 = vector.load %arg1[%c0, %c0_0] : memref<8x256xf32, #tpu.memory_space<vmem>>, vector<8x256xf32>
    %cst = arith.constant 5.000000e-01 : f32
    %1 = vector.broadcast %cst : f32 to vector<8x256xf32>
    %2 = arith.mulf %1, %0 : vector<8x256xf32>
    %3 = arith.truncf %0 : vector<8x256xf32> to vector<8x256xbf16>
    %c0_1 = arith.constant 0 : index
    %c0_2 = arith.constant 0 : index
    %4 = vector.load %arg2[%c0_1, %c0_2] : memref<256x1024xbf16, #tpu.memory_space<vmem>>, vector<256x256xbf16>
    %cst_3 = arith.constant dense<0.000000e+00> : vector<8x256xf32>
    %5 = tpu.matmul %3, %4, %cst_3 {dimension_numbers = #tpu.dot_dimension_numbers<[1], [0], [0], [1], [0, 0, 1, 1], [], []>} : vector<8x256xbf16>, vector<256x256xbf16>, vector<8x256xf32> -> vector<8x256xf32>
    %6 = math.tanh %5 : vector<8x256xf32>
    %7 = arith.mulf %2, %6 : vector<8x256xf32>
    %8 = arith.addf %7, %2 : vector<8x256xf32>
    %c0_4 = arith.constant 0 : index
    %c0_5 = arith.constant 0 : index
    %c0_6 = arith.constant 0 : index
    %c0_7 = arith.constant 0 : index
    %9 = vector.load %arg3[%c0_4, %c0_5, %c0_6, %c0_7] : memref<1x4x8x256xf32, #tpu.memory_space<vmem>>, vector<1x1x8x256xf32>
    %10 = vector.shape_cast %9 : vector<1x1x8x256xf32> to vector<8x256xf32>
    %11 = vector.shape_cast %8 : vector<8x256xf32> to vector<1x1x8x256xf32>
    tpu.vector_store %arg3[%c0_4, %c0_5, %c0_6, %c0_7], %11 {strides = array<i32>} : memref<1x4x8x256xf32, #tpu.memory_space<vmem>>, vector<1x1x8x256xf32>,
    %c0_8 = arith.constant 0 : index
    %c256 = arith.constant 256 : index
    %12 = vector.load %arg2[%c0_8, %c256] : memref<256x1024xbf16, #tpu.memory_space<vmem>>, vector<256x256xbf16>
    %cst_9 = arith.constant dense<0.000000e+00> : vector<8x256xf32>
    %13 = tpu.matmul %3, %12, %cst_9 {dimension_numbers = #tpu.dot_dimension_numbers<[1], [0], [0], [1], [0, 0, 1, 1], [], []>} : vector<8x256xbf16>, vector<256x256xbf16>, vector<8x256xf32> -> vector<8x256xf32>
    %14 = math.tanh %13 : vector<8x256xf32>
    %15 = arith.mulf %2, %14 : vector<8x256xf32>
    %16 = arith.addf %15, %2 : vector<8x256xf32>
    %c0_10 = arith.constant 0 : index
    %c1 = arith.constant 1 : index
    %c0_11 = arith.constant 0 : index
    %c0_12 = arith.constant 0 : index
    %17 = vector.load %arg3[%c0_10, %c1, %c0_11, %c0_12] : memref<1x4x8x256xf32, #tpu.memory_space<vmem>>, vector<1x1x8x256xf32>
    %18 = vector.shape_cast %17 : vector<1x1x8x256xf32> to vector<8x256xf32>
    %19 = vector.shape_cast %16 : vector<8x256xf32> to vector<1x1x8x256xf32>
    tpu.vector_store %arg3[%c0_10, %c1, %c0_11, %c0_12], %19 {strides = array<i32>} : memref<1x4x8x256xf32, #tpu.memory_space<vmem>>, vector<1x1x8x256xf32>,
    %c0_13 = arith.constant 0 : index
    %c512 = arith.constant 512 : index
    %20 = vector.load %arg2[%c0_13, %c512] : memref<256x1024xbf16, #tpu.memory_space<vmem>>, vector<256x256xbf16>
    %cst_14 = arith.constant dense<0.000000e+00> : vector<8x256xf32>
    %21 = tpu.matmul %3, %20, %cst_14 {dimension_numbers = #tpu.dot_dimension_numbers<[1], [0], [0], [1], [0, 0, 1, 1], [], []>} : vector<8x256xbf16>, vector<256x256xbf16>, vector<8x256xf32> -> vector<8x256xf32>
    %22 = math.tanh %21 : vector<8x256xf32>
    %23 = arith.mulf %2, %22 : vector<8x256xf32>
    %24 = arith.addf %23, %2 : vector<8x256xf32>
    %c0_15 = arith.constant 0 : index
    %c2 = arith.constant 2 : index
    %c0_16 = arith.constant 0 : index
    %c0_17 = arith.constant 0 : index
    %25 = vector.load %arg3[%c0_15, %c2, %c0_16, %c0_17] : memref<1x4x8x256xf32, #tpu.memory_space<vmem>>, vector<1x1x8x256xf32>
    %26 = vector.shape_cast %25 : vector<1x1x8x256xf32> to vector<8x256xf32>
    %27 = vector.shape_cast %24 : vector<8x256xf32> to vector<1x1x8x256xf32>
    tpu.vector_store %arg3[%c0_15, %c2, %c0_16, %c0_17], %27 {strides = array<i32>} : memref<1x4x8x256xf32, #tpu.memory_space<vmem>>, vector<1x1x8x256xf32>,
    %c0_18 = arith.constant 0 : index
    %c768 = arith.constant 768 : index
    %28 = vector.load %arg2[%c0_18, %c768] : memref<256x1024xbf16, #tpu.memory_space<vmem>>, vector<256x256xbf16>
    %cst_19 = arith.constant dense<0.000000e+00> : vector<8x256xf32>
    %29 = tpu.matmul %3, %28, %cst_19 {dimension_numbers = #tpu.dot_dimension_numbers<[1], [0], [0], [1], [0, 0, 1, 1], [], []>} : vector<8x256xbf16>, vector<256x256xbf16>, vector<8x256xf32> -> vector<8x256xf32>
    %30 = math.tanh %29 : vector<8x256xf32>
    %31 = arith.mulf %2, %30 : vector<8x256xf32>
    %32 = arith.addf %31, %2 : vector<8x256xf32>
    %c0_20 = arith.constant 0 : index
    %c3 = arith.constant 3 : index
    %c0_21 = arith.constant 0 : index
    %c0_22 = arith.constant 0 : index
    %33 = vector.load %arg3[%c0_20, %c3, %c0_21, %c0_22] : memref<1x4x8x256xf32, #tpu.memory_space<vmem>>, vector<1x1x8x256xf32>
    %34 = vector.shape_cast %33 : vector<1x1x8x256xf32> to vector<8x256xf32>
    %35 = vector.shape_cast %32 : vector<8x256xf32> to vector<1x1x8x256xf32>
    tpu.vector_store %arg3[%c0_20, %c3, %c0_21, %c0_22], %35 {strides = array<i32>} : memref<1x4x8x256xf32, #tpu.memory_space<vmem>>, vector<1x1x8x256xf32>,
    return
  }
  func.func @transform_0(%arg0: i32) -> (i32, i32) {
    %c0_i32 = arith.constant 0 : i32
    %c0_i32_0 = arith.constant 0 : i32
    return %arg0, %c0_i32 : i32, i32
  }
  func.func @transform_1(%arg0: i32) -> (i32, i32) {
    %c0_i32 = arith.constant 0 : i32
    %c0_i32_0 = arith.constant 0 : i32
    %c0_i32_1 = arith.constant 0 : i32
    return %c0_i32, %c0_i32_0 : i32, i32
  }
  func.func @transform_2(%arg0: i32) -> (i32, i32, i32, i32) {
    %c0_i32 = arith.constant 0 : i32
    %c0_i32_0 = arith.constant 0 : i32
    %c0_i32_1 = arith.constant 0 : i32
    %c0_i32_2 = arith.constant 0 : i32
    return %arg0, %c0_i32, %c0_i32_0, %c0_i32_1 : i32, i32, i32, i32
  }
}

</mosaic_0001>

<llo_original>
// kernel: tpu_custom_call.1
$region0: #{tpu_custom_call.1}
  #allocation0 [shape = 'u32[]', space=smem, size = 0x4, offset = 0x4, fixed_abs, tag = 'smem constant byte address 0x4 - core index']
  #allocation1 [shape = 'u32[144,128]{1,0:T(1,128)}', space=vmem, size = 0x12000, scoped, tag = 'internal scratch']
  %s0 = inlined_call_operand.hbm [shape: f32[16,256], index: 0, kind: input, shape index: {}]
  %s1 = inlined_call_operand.hbm [shape: bf16[256,1024], index: 1, kind: input, shape index: {}]
  %s2 = inlined_call_operand.hbm [shape: f32[2,4,8,256], index: 2, kind: output, shape index: {}]
  %s3 = sld [smem:[#allocation0]]
  $region49: #{tpu_custom_call.1} parent=0
    _
  %s5 = ssub.s32 1, %s3
  %s6 = scalar_select 0, %s5, %s3
  $region1: #{tpu_custom_call.1} parent=0
    #allocation2 [shape = 'u8[16384]{0}', space=vmem, size = 0x4000, scoped, tag = 'input window, operand 0']
    #allocation3 [shape = 's32[2]{0}', space=sflag, size = 0x8, scoped, tag = 'scoped memory for tpu_custom_call.1']
    #allocation4 [shape = 's32[2]{0}', space=sflag, size = 0x8, scoped, tag = 'scoped memory for tpu_custom_call.1']
    #allocation5 [shape = 'u8[524288]{0}', space=vmem, size = 0x80000, scoped, tag = 'input window, operand 1, single buffered']
    #allocation6 [shape = 's32[1]{0}', space=sflag, size = 0x4, scoped, tag = 'scoped memory for tpu_custom_call.1']
    #allocation7 [shape = 'u8[65536]{0}', space=vmem, size = 0x10000, scoped, tag = 'output window, operand 0']
    %7 = vsyncpa [#allocation3], 0
    %s8 = scalar_lea.sflag [#allocation3], 1
    %9 = vsyncpa %s8, 0
    %10 = vsyncpa [#allocation6], 0
    %11 = vsyncpa [#allocation4], 0
    %s12 = scalar_lea.sflag [#allocation4], 1
    %13 = vsyncpa %s12, 0
    loop: start=0, step=1, limit=4
    $region2: #{tpu_custom_call.1} parent=1 // loop_pre_header
      _
    $region3: #{tpu_custom_call.1} parent=1 // loop_header
      %s15 = sphi 0, %s19
      %p16 = scmp.ge.s32.totalorder %s15, 4
      %s25 = sphi 0, %s27
      %s28 = sphi 0, %s25
      %s29 = sphi 0, %s28
      %s45 = sphi 0, %s29
      %s49 = sphi 0, %s49
      %s51 = sphi 0, %s49
      %s52 = sphi 0, %s51
      %s66 = sphi 0, %s52
      %s72 = sphi 0, %s74
      %s75 = sphi 0, %s72
      %s76 = sphi 0, %s75
      %s92 = sphi 0, %s76
    $region4: #{tpu_custom_call.1} parent=1 // loop_header_branch
      %18 = sbr.rel (%p16) target = $region8
    $region5: #{tpu_custom_call.1} parent=1 // loop_body
      %s20 = ssub.s32 %s15, 1
      %s21 = ssub.s32 %s15, 2
      %s22 = sadd.s32 %s15, 1
      %s23 = ssub.s32 %s15, %s22
      %p24 = scmp.eq.s32.totalorder %s23, 0
      %s26 = sadd.s32 %s25, 1
      %s27 = scalar_select %p24, %s25, %s26
      %p30 = pneg %p24
      %p31 = scmp.eq.s32.totalorder %s15, 1
      %p32 = por %p30, %p31
      %p33 = scmp.ne.s32.totalorder %s25, %s28
      %p34 = scmp.eq.s32.totalorder %s15, 0
      %p35 = por %p33, %p34
      %p36 = scmp.ne.s32.totalorder %s25, %s28
      %p37 = scmp.eq.s32.totalorder %s20, 1
      %p38 = por %p36, %p37
      %p39 = scmp.ne.s32.totalorder %s28, %s29
      %p40 = scmp.eq.s32.totalorder %s20, 0
      %p41 = por %p39, %p40
      %p42 = scmp.ne.s32.totalorder %s28, %s29
      %p43 = scmp.eq.s32.totalorder %s21, 1
      %p44 = por %p42, %p43
      %p46 = scmp.ne.s32.totalorder %s29, %s45
      %p47 = scmp.eq.s32.totalorder %s21, 0
      %p48 = por %p46, %p47
      %s50 = sadd.s32 %s49, 1
      %p53 = scmp.eq.s32.totalorder %s15, 1
      %p54 = scmp.ne.s32.totalorder %s49, %s51
      %p55 = scmp.eq.s32.totalorder %s15, 0
      %p56 = por %p54, %p55
      %p57 = scmp.ne.s32.totalorder %s49, %s51
      %p58 = scmp.eq.s32.totalorder %s20, 1
      %p59 = por %p57, %p58
      %p60 = scmp.ne.s32.totalorder %s51, %s52
      %p61 = scmp.eq.s32.totalorder %s20, 0
      %p62 = por %p60, %p61
      %p63 = scmp.ne.s32.totalorder %s51, %s52
      %p64 = scmp.eq.s32.totalorder %s21, 1
      %p65 = por %p63, %p64
      %p67 = scmp.ne.s32.totalorder %s52, %s66
      %p68 = scmp.eq.s32.totalorder %s21, 0
      %p69 = por %p67, %p68
      %s70 = ssub.s32 %s15, %s22
      %p71 = scmp.eq.s32.totalorder %s70, 0
      %s73 = sadd.s32 %s72, 1
      %s74 = scalar_select %p71, %s72, %s73
      %p77 = pneg %p71
      %p78 = scmp.eq.s32.totalorder %s15, 1
      %p79 = por %p77, %p78
      %p80 = scmp.ne.s32.totalorder %s72, %s75
      %p81 = scmp.eq.s32.totalorder %s15, 0
      %p82 = por %p80, %p81
      %p83 = scmp.ne.s32.totalorder %s72, %s75
      %p84 = scmp.eq.s32.totalorder %s20, 1
      %p85 = por %p83, %p84
      %p86 = scmp.ne.s32.totalorder %s75, %s76
      %p87 = scmp.eq.s32.totalorder %s20, 0
      %p88 = por %p86, %p87
      %p89 = scmp.ne.s32.totalorder %s75, %s76
      %p90 = scmp.eq.s32.totalorder %s21, 1
      %p91 = por %p89, %p90
      %p93 = scmp.ne.s32.totalorder %s76, %s92
      %p94 = scmp.eq.s32.totalorder %s21, 0
      %p95 = por %p93, %p94
      %p96 = scmp.le.s32.totalorder 1, %s15
      %p97 = scmp.lt.s32.totalorder %s15, 3
      %p98 = pnand %p96, %p97
      %p99 = pneg %p98
      // Predicated region
      $region9: #{tpu_custom_call.1} parent=5 // pred_check
        _
      $region10: #{tpu_custom_call.1} parent=5 // pred_check_branch
        %101 = sbr.rel (%p98) target = $region12
      $region11: #{tpu_custom_call.1} parent=5 // pred_region
        %s102 = ssub.s32 %s15, 1
        // Predicated region
        $region13: #{tpu_custom_call.1} parent=11 // pred_check
          %p103 = pneg %p62
        $region14: #{tpu_custom_call.1} parent=11 // pred_check_branch
          %105 = sbr.rel (%p103) target = $region16
        $region15: #{tpu_custom_call.1} parent=11 // pred_region
          %s107 = ssub.s32 16384, 16384
          %108 = vsyncadd [#allocation6], %s107
          %s109 = sshll.u32 [#allocation5], 4
          %s110 = int_to_ptr.vmem [resolvable:$true] %s109
          %115 = dma.hbm_to_vmem [thread:$0]  %s1, 16384, %s110, [#allocation6], 512, 512, 32
        $region16: #{tpu_custom_call.1} parent=11 // pred_fallthru
          _
      $region12: #{tpu_custom_call.1} parent=5 // pred_fallthru
        _
      %p116 = scmp.lt.s32.totalorder %s15, 2
      // Predicated region
      $region17: #{tpu_custom_call.1} parent=5 // pred_check
        %p117 = pneg %p116
      $region18: #{tpu_custom_call.1} parent=5 // pred_check_branch
        %119 = sbr.rel (%p117) target = $region20
      $region19: #{tpu_custom_call.1} parent=5 // pred_region
        // Predicated region
        $region21: #{tpu_custom_call.1} parent=19 // pred_check
          %p120 = pneg %p35
        $region22: #{tpu_custom_call.1} parent=19 // pred_check_branch
          %122 = sbr.rel (%p120) target = $region24
        $region23: #{tpu_custom_call.1} parent=19 // pred_region
          %s123 = sand.u32 %s25, 1
          %s124 = scalar_lea.sflag [#allocation3], %s123
          %s125 = sand.u32 %s25, 1
          %s126 = smul.addr %s125, 16
          %s127 = scalar_lea.vmem [#allocation2], %s126
          %s129 = ssub.s32 256, 256
          %130 = vsyncadd %s124, %s129
          %s131 = smul.addr %s15, 2
          %s132 = smul.addr %s131, 128
          %s133 = scalar_lea.hbm %s0, %s132
          %s135 = sshll.u32 %s127, 4
          %s136 = int_to_ptr.vmem [resolvable:$true] %s135
          %138 = dma.hbm_to_vmem [thread:$0]  %s133, 256, %s136, %s124
        $region24: #{tpu_custom_call.1} parent=19 // pred_fallthru
          _
      $region20: #{tpu_custom_call.1} parent=5 // pred_fallthru
        _
      %p139 = scmp.le.s32.totalorder 1, %s15
      %p140 = scmp.lt.s32.totalorder %s15, 3
      %p141 = pnand %p139, %p140
      %p142 = pneg %p141
      // Predicated region
      $region25: #{tpu_custom_call.1} parent=5 // pred_check
        _
      $region26: #{tpu_custom_call.1} parent=5 // pred_check_branch
        %144 = sbr.rel (%p141) target = $region28
      $region27: #{tpu_custom_call.1} parent=5 // pred_region
        %s145 = ssub.s32 %s15, 1
        %s146 = sand.u32 %s28, 1
        %s147 = scalar_lea.sflag [#allocation3], %s146
        %s148 = sand.u32 %s28, 1
        %s149 = smul.addr %s148, 16
        %s150 = scalar_lea.vmem [#allocation2], %s149
        // Predicated region
        $region29: #{tpu_custom_call.1} parent=27 // pred_check
          %p151 = pneg %p41
        $region30: #{tpu_custom_call.1} parent=27 // pred_check_branch
          %153 = sbr.rel (%p151) target = $region32
        $region31: #{tpu_custom_call.1} parent=27 // pred_region
          %154 = dma.done %s147, 256
        $region32: #{tpu_custom_call.1} parent=27 // pred_fallthru
          _
        // Predicated region
        $region33: #{tpu_custom_call.1} parent=27 // pred_check
          %p155 = pneg %p62
        $region34: #{tpu_custom_call.1} parent=27 // pred_check_branch
          %157 = sbr.rel (%p155) target = $region36
        $region35: #{tpu_custom_call.1} parent=27 // pred_region
          %158 = dma.done [#allocation6], 16384
        $region36: #{tpu_custom_call.1} parent=27 // pred_fallthru
          _
        %s159 = sand.u32 %s28, 1
        %s160 = scalar_lea.sflag [#allocation3], %s159
        %s161 = sand.u32 %s28, 1
        %s162 = smul.addr %s161, 16
        %s163 = scalar_lea.vmem [#allocation2], %s162
        %p164 = pneg %p41
        %p165 = pneg %p38
        %p166 = pneg %p62
        %p167 = pneg %p59
        %p168 = pneg %p88
        %p169 = pneg %p85
        %s170 = sand.u32 %s75, 1
        %s171 = scalar_lea.sflag [#allocation4], %s170
        %s172 = sand.u32 %s75, 1
        %s173 = smul.addr %s172, 64
        %s174 = scalar_lea.vmem [#allocation7], %s173
        %v175 = vld [vmem:[%s150] sm:$0xff]
        %v176 = vld [vmem:[%s150 + $0x8] sm:$0xff]
        %v177 = vmul.f32 %v175, 0.5
        %v178 = vmul.f32 %v176, 0.5
        %v179 = vpack.c.bf16 %v175, %v175
        %v180 = vpack.c.bf16 %v176, %v176
        %v181 = vld [vmem:[#allocation5] sm:$0xff]
        %v182 = vld [vmem:[#allocation5 + $0x20] sm:$0xff]
        %v183 = vld [vmem:[#allocation5 + $0x40] sm:$0xff]
        %v184 = vld [vmem:[#allocation5 + $0x60] sm:$0xff]
        %v185 = vld [vmem:[#allocation5 + $0x80] sm:$0xff]
        %v186 = vld [vmem:[#allocation5 + $0xa0] sm:$0xff]
        %v187 = vld [vmem:[#allocation5 + $0xc0] sm:$0xff]
        %v188 = vld [vmem:[#allocation5 + $0xe0] sm:$0xff]
        %v189 = vld [vmem:[#allocation5 + $0x100] sm:$0xff]
        %v190 = vld [vmem:[#allocation5 + $0x120] sm:$0xff]
        %v191 = vld [vmem:[#allocation5 + $0x140] sm:$0xff]
        %v192 = vld [vmem:[#allocation5 + $0x160] sm:$0xff]
        %v193 = vld [vmem:[#allocation5 + $0x180] sm:$0xff]
        %v194 = vld [vmem:[#allocation5 + $0x1a0] sm:$0xff]
        %v195 = vld [vmem:[#allocation5 + $0x1c0] sm:$0xff]
        %v196 = vld [vmem:[#allocation5 + $0x1e0] sm:$0xff]
        %v197 = vld [vmem:[#allocation5 + $0x200] sm:$0xff]
        %v198 = vld [vmem:[#allocation5 + $0x220] sm:$0xff]
        %v199 = vld [vmem:[#allocation5 + $0x240] sm:$0xff]
        %v200 = vld [vmem:[#allocation5 + $0x260] sm:$0xff]
        %v201 = vld [vmem:[#allocation5 + $0x280] sm:$0xff]
        %v202 = vld [vmem:[#allocation5 + $0x2a0] sm:$0xff]
        %v203 = vld [vmem:[#allocation5 + $0x2c0] sm:$0xff]
        %v204 = vld [vmem:[#allocation5 + $0x2e0] sm:$0xff]
        %v205 = vld [vmem:[#allocation5 + $0x300] sm:$0xff]
        %v206 = vld [vmem:[#allocation5 + $0x320] sm:$0xff]
        %v207 = vld [vmem:[#allocation5 + $0x340] sm:$0xff]
        %v208 = vld [vmem:[#allocation5 + $0x360] sm:$0xff]
        %v209 = vld [vmem:[#allocation5 + $0x380] sm:$0xff]
        %v210 = vld [vmem:[#allocation5 + $0x3a0] sm:$0xff]
        %v211 = vld [vmem:[#allocation5 + $0x3c0] sm:$0xff]
        %v212 = vld [vmem:[#allocation5 + $0x3e0] sm:$0xff]
        %v245 = vunpack.c.l.b16 %v181
        %v246 = vunpack.c.h.b16 %v181
        %v247 = vunpack.c.l.b16 %v182
        %v248 = vunpack.c.h.b16 %v182
        %v249 = vunpack.c.l.b16 %v183
        %v250 = vunpack.c.h.b16 %v183
        %v251 = vunpack.c.l.b16 %v184
        %v252 = vunpack.c.h.b16 %v184
        %v253 = vunpack.c.l.b16 %v185
        %v254 = vunpack.c.h.b16 %v185
        %v255 = vunpack.c.l.b16 %v186
        %v256 = vunpack.c.h.b16 %v186
        %v257 = vunpack.c.l.b16 %v187
        %v258 = vunpack.c.h.b16 %v187
        %v259 = vunpack.c.l.b16 %v188
        %v260 = vunpack.c.h.b16 %v188
        %v261 = vunpack.c.l.b16 %v189
        %v262 = vunpack.c.h.b16 %v189
        %v263 = vunpack.c.l.b16 %v190
        %v264 = vunpack.c.h.b16 %v190
        %v265 = vunpack.c.l.b16 %v191
        %v266 = vunpack.c.h.b16 %v191
        %v267 = vunpack.c.l.b16 %v192
        %v268 = vunpack.c.h.b16 %v192
        %v269 = vunpack.c.l.b16 %v193
        %v270 = vunpack.c.h.b16 %v193
        %v271 = vunpack.c.l.b16 %v194
        %v272 = vunpack.c.h.b16 %v194
        %v273 = vunpack.c.l.b16 %v195
        %v274 = vunpack.c.h.b16 %v195
        %v275 = vunpack.c.l.b16 %v196
        %v276 = vunpack.c.h.b16 %v196
        %v277 = vunpack.c.l.b16 %v197
        %v278 = vunpack.c.h.b16 %v197
        %v279 = vunpack.c.l.b16 %v198
        %v280 = vunpack.c.h.b16 %v198
        %v281 = vunpack.c.l.b16 %v199
        %v282 = vunpack.c.h.b16 %v199
        %v283 = vunpack.c.l.b16 %v200
        %v284 = vunpack.c.h.b16 %v200
        %v285 = vunpack.c.l.b16 %v201
        %v286 = vunpack.c.h.b16 %v201
        %v287 = vunpack.c.l.b16 %v202
        %v288 = vunpack.c.h.b16 %v202
        %v289 = vunpack.c.l.b16 %v203
        %v290 = vunpack.c.h.b16 %v203
        %v291 = vunpack.c.l.b16 %v204
        %v292 = vunpack.c.h.b16 %v204
        %v293 = vunpack.c.l.b16 %v205
        %v294 = vunpack.c.h.b16 %v205
        %v295 = vunpack.c.l.b16 %v206
        %v296 = vunpack.c.h.b16 %v206
        %v297 = vunpack.c.l.b16 %v207
        %v298 = vunpack.c.h.b16 %v207
        %v299 = vunpack.c.l.b16 %v208
        %v300 = vunpack.c.h.b16 %v208
        %v301 = vunpack.c.l.b16 %v209
        %v302 = vunpack.c.h.b16 %v209
        %v303 = vunpack.c.l.b16 %v210
        %v304 = vunpack.c.h.b16 %v210
        %v305 = vunpack.c.l.b16 %v211
        %v306 = vunpack.c.h.b16 %v211
        %v307 = vunpack.c.l.b16 %v212
        %v308 = vunpack.c.h.b16 %v212
        %v309 = vpack.c.b16 %v247, %v245
        %v310 = vpack.c.b16 %v248, %v246
        %v311 = vpack.c.b16 %v251, %v249
        %v312 = vpack.c.b16 %v252, %v250
        %v313 = vpack.c.b16 %v255, %v253
        %v314 = vpack.c.b16 %v256, %v254
        %v315 = vpack.c.b16 %v259, %v257
        %v316 = vpack.c.b16 %v260, %v258
        %v317 = vpack.c.b16 %v263, %v261
        %v318 = vpack.c.b16 %v264, %v262
        %v319 = vpack.c.b16 %v267, %v265
        %v320 = vpack.c.b16 %v268, %v266
        %v321 = vpack.c.b16 %v271, %v269
        %v322 = vpack.c.b16 %v272, %v270
        %v323 = vpack.c.b16 %v275, %v273
        %v324 = vpack.c.b16 %v276, %v274
        %v325 = vpack.c.b16 %v279, %v277
        %v326 = vpack.c.b16 %v280, %v278
        %v327 = vpack.c.b16 %v283, %v281
        %v328 = vpack.c.b16 %v284, %v282
        %v329 = vpack.c.b16 %v287, %v285
        %v330 = vpack.c.b16 %v288, %v286
        %v331 = vpack.c.b16 %v291, %v289
        %v332 = vpack.c.b16 %v292, %v290
        %v333 = vpack.c.b16 %v295, %v293
        %v334 = vpack.c.b16 %v296, %v294
        %v335 = vpack.c.b16 %v299, %v297
        %v336 = vpack.c.b16 %v300, %v298
        %v337 = vpack.c.b16 %v303, %v301
        %v338 = vpack.c.b16 %v304, %v302
        %v339 = vpack.c.b16 %v307, %v305
        %v340 = vpack.c.b16 %v308, %v306
        %373 = vmatprep.subr.bf16.mxu0 %v310
        %374 = vmatpush1.bf16.msra.mxu0 %v309
        %375 = vmatprep.subr.bf16.mxu0 %v312
        %376 = vmatpush1.bf16.msra.mxu0 %v311
        %377 = vmatprep.subr.bf16.mxu0 %v314
        %378 = vmatpush1.bf16.msra.mxu0 %v313
        %379 = vmatprep.subr.bf16.mxu0 %v316
        %380 = vmatpush1.bf16.msra.mxu0 %v315
        %381 = vmatprep.subr.bf16.mxu0 %v318
        %382 = vmatpush1.bf16.msra.mxu0 %v317
        %383 = vmatprep.subr.bf16.mxu0 %v320
        %384 = vmatpush1.bf16.msra.mxu0 %v319
        %385 = vmatprep.subr.bf16.mxu0 %v322
        %386 = vmatpush1.bf16.msra.mxu0 %v321
        %387 = vmatprep.subr.bf16.mxu0 %v324
        %388 = vmatpush1.bf16.msra.mxu0 %v323
        %389 = vmatprep.subr.bf16.mxu0 %v326
        %390 = vmatpush1.bf16.msra.mxu0 %v325
        %391 = vmatprep.subr.bf16.mxu0 %v328
        %392 = vmatpush1.bf16.msra.mxu0 %v327
        %393 = vmatprep.subr.bf16.mxu0 %v330
        %394 = vmatpush1.bf16.msra.mxu0 %v329
        %395 = vmatprep.subr.bf16.mxu0 %v332
        %396 = vmatpush1.bf16.msra.mxu0 %v331
        %397 = vmatprep.subr.bf16.mxu0 %v334
        %398 = vmatpush1.bf16.msra.mxu0 %v333
        %399 = vmatprep.subr.bf16.mxu0 %v336
        %400 = vmatpush1.bf16.msra.mxu0 %v335
        %401 = vmatprep.subr.bf16.mxu0 %v338
        %402 = vmatpush1.bf16.msra.mxu0 %v337
        %403 = vmatprep.subr.bf16.mxu0 %v340
        %404 = vmatpush1.bf16.msra.mxu0 %v339
        %405 = vmatprep.mubr.bf16.mxu0 %v180
        %406 = vmatmul.mubr.bf16.gmra.mrb[0].mxu0 %v179
        %v407 = vpop.f32.mrb[0].mxu0
        %v408 = vadd.f32 0.0, %v407
        %v409 = vpop.f32.mrb[0].mxu0
        %v410 = vadd.f32 0.0, %v409
        %v411 = vpop.f32.mrb[0].mxu0
        %v412 = vpop.f32.mrb[0].mxu0
        %413 = vdwg.mxu0
        %v414 = vtanh.pop %v408
        %v415 = vtanh.pop %v410
        %v416 = vmul.f32 %v177, %v414
        %v417 = vmul.f32 %v178, %v415
        %v418 = vadd.f32 %v416, %v177
        %v419 = vadd.f32 %v417, %v178
        %420 = vst [vmem:[%s174] sm:$0xff] %v418
        %421 = vst [vmem:[%s174 + $0x8] sm:$0xff] %v419
        %v422 = vld [vmem:[#allocation5 + $0x8] sm:$0xff]
        %v423 = vld [vmem:[#allocation5 + $0x28] sm:$0xff]
        %v424 = vld [vmem:[#allocation5 + $0x48] sm:$0xff]
        %v425 = vld [vmem:[#allocation5 + $0x68] sm:$0xff]
        %v426 = vld [vmem:[#allocation5 + $0x88] sm:$0xff]
        %v427 = vld [vmem:[#allocation5 + $0xa8] sm:$0xff]
        %v428 = vld [vmem:[#allocation5 + $0xc8] sm:$0xff]
        %v429 = vld [vmem:[#allocation5 + $0xe8] sm:$0xff]
        %v430 = vld [vmem:[#allocation5 + $0x108] sm:$0xff]
        %v431 = vld [vmem:[#allocation5 + $0x128] sm:$0xff]
        %v432 = vld [vmem:[#allocation5 + $0x148] sm:$0xff]
        %v433 = vld [vmem:[#allocation5 + $0x168] sm:$0xff]
        %v434 = vld [vmem:[#allocation5 + $0x188] sm:$0xff]
        %v435 = vld [vmem:[#allocation5 + $0x1a8] sm:$0xff]
        %v436 = vld [vmem:[#allocation5 + $0x1c8] sm:$0xff]
        %v437 = vld [vmem:[#allocation5 + $0x1e8] sm:$0xff]
        %v438 = vld [vmem:[#allocation5 + $0x208] sm:$0xff]
        %v439 = vld [vmem:[#allocation5 + $0x228] sm:$0xff]
        %v440 = vld [vmem:[#allocation5 + $0x248] sm:$0xff]
        %v441 = vld [vmem:[#allocation5 + $0x268] sm:$0xff]
        %v442 = vld [vmem:[#allocation5 + $0x288] sm:$0xff]
        %v443 = vld [vmem:[#allocation5 + $0x2a8] sm:$0xff]
        %v444 = vld [vmem:[#allocation5 + $0x2c8] sm:$0xff]
        %v445 = vld [vmem:[#allocation5 + $0x2e8] sm:$0xff]
        %v446 = vld [vmem:[#allocation5 + $0x308] sm:$0xff]
        %v447 = vld [vmem:[#allocation5 + $0x328] sm:$0xff]
        %v448 = vld [vmem:[#allocation5 + $0x348] sm:$0xff]
        %v449 = vld [vmem:[#allocation5 + $0x368] sm:$0xff]
        %v450 = vld [vmem:[#allocation5 + $0x388] sm:$0xff]
        %v451 = vld [vmem:[#allocation5 + $0x3a8] sm:$0xff]
        %v452 = vld [vmem:[#allocation5 + $0x3c8] sm:$0xff]
        %v453 = vld [vmem:[#allocation5 + $0x3e8] sm:$0xff]
        %v486 = vunpack.c.l.b16 %v422
        %v487 = vunpack.c.h.b16 %v422
        %v488 = vunpack.c.l.b16 %v423
        %v489 = vunpack.c.h.b16 %v423
        %v490 = vunpack.c.l.b16 %v424
        %v491 = vunpack.c.h.b16 %v424
        %v492 = vunpack.c.l.b16 %v425
        %v493 = vunpack.c.h.b16 %v425
        %v494 = vunpack.c.l.b16 %v426
        %v495 = vunpack.c.h.b16 %v426
        %v496 = vunpack.c.l.b16 %v427
        %v497 = vunpack.c.h.b16 %v427
        %v498 = vunpack.c.l.b16 %v428
        %v499 = vunpack.c.h.b16 %v428
        %v500 = vunpack.c.l.b16 %v429
        %v501 = vunpack.c.h.b16 %v429
        %v502 = vunpack.c.l.b16 %v430
        %v503 = vunpack.c.h.b16 %v430
        %v504 = vunpack.c.l.b16 %v431
        %v505 = vunpack.c.h.b16 %v431
        %v506 = vunpack.c.l.b16 %v432
        %v507 = vunpack.c.h.b16 %v432
        %v508 = vunpack.c.l.b16 %v433
        %v509 = vunpack.c.h.b16 %v433
        %v510 = vunpack.c.l.b16 %v434
        %v511 = vunpack.c.h.b16 %v434
        %v512 = vunpack.c.l.b16 %v435
        %v513 = vunpack.c.h.b16 %v435
        %v514 = vunpack.c.l.b16 %v436
        %v515 = vunpack.c.h.b16 %v436
        %v516 = vunpack.c.l.b16 %v437
        %v517 = vunpack.c.h.b16 %v437
        %v518 = vunpack.c.l.b16 %v438
        %v519 = vunpack.c.h.b16 %v438
        %v520 = vunpack.c.l.b16 %v439
        %v521 = vunpack.c.h.b16 %v439
        %v522 = vunpack.c.l.b16 %v440
        %v523 = vunpack.c.h.b16 %v440
        %v524 = vunpack.c.l.b16 %v441
        %v525 = vunpack.c.h.b16 %v441
        %v526 = vunpack.c.l.b16 %v442
        %v527 = vunpack.c.h.b16 %v442
        %v528 = vunpack.c.l.b16 %v443
        %v529 = vunpack.c.h.b16 %v443
        %v530 = vunpack.c.l.b16 %v444
        %v531 = vunpack.c.h.b16 %v444
        %v532 = vunpack.c.l.b16 %v445
        %v533 = vunpack.c.h.b16 %v445
        %v534 = vunpack.c.l.b16 %v446
        %v535 = vunpack.c.h.b16 %v446
        %v536 = vunpack.c.l.b16 %v447
        %v537 = vunpack.c.h.b16 %v447
        %v538 = vunpack.c.l.b16 %v448
        %v539 = vunpack.c.h.b16 %v448
        %v540 = vunpack.c.l.b16 %v449
        %v541 = vunpack.c.h.b16 %v449
        %v542 = vunpack.c.l.b16 %v450
        %v543 = vunpack.c.h.b16 %v450
        %v544 = vunpack.c.l.b16 %v451
        %v545 = vunpack.c.h.b16 %v451
        %v546 = vunpack.c.l.b16 %v452
        %v547 = vunpack.c.h.b16 %v452
        %v548 = vunpack.c.l.b16 %v453
        %v549 = vunpack.c.h.b16 %v453
        %v550 = vpack.c.b16 %v488, %v486
        %v551 = vpack.c.b16 %v489, %v487
        %v552 = vpack.c.b16 %v492, %v490
        %v553 = vpack.c.b16 %v493, %v491
        %v554 = vpack.c.b16 %v496, %v494
        %v555 = vpack.c.b16 %v497, %v495
        %v556 = vpack.c.b16 %v500, %v498
        %v557 = vpack.c.b16 %v501, %v499
        %v558 = vpack.c.b16 %v504, %v502
        %v559 = vpack.c.b16 %v505, %v503
        %v560 = vpack.c.b16 %v508, %v506
        %v561 = vpack.c.b16 %v509, %v507
        %v562 = vpack.c.b16 %v512, %v510
        %v563 = vpack.c.b16 %v513, %v511
        %v564 = vpack.c.b16 %v516, %v514
        %v565 = vpack.c.b16 %v517, %v515
        %v566 = vpack.c.b16 %v520, %v518
        %v567 = vpack.c.b16 %v521, %v519
        %v568 = vpack.c.b16 %v524, %v522
        %v569 = vpack.c.b16 %v525, %v523
        %v570 = vpack.c.b16 %v528, %v526
        %v571 = vpack.c.b16 %v529, %v527
        %v572 = vpack.c.b16 %v532, %v530
        %v573 = vpack.c.b16 %v533, %v531
        %v574 = vpack.c.b16 %v536, %v534
        %v575 = vpack.c.b16 %v537, %v535
        %v576 = vpack.c.b16 %v540, %v538
        %v577 = vpack.c.b16 %v541, %v539
        %v578 = vpack.c.b16 %v544, %v542
        %v579 = vpack.c.b16 %v545, %v543
        %v580 = vpack.c.b16 %v548, %v546
        %v581 = vpack.c.b16 %v549, %v547
        %614 = vmatprep.subr.bf16.mxu0 %v551
        %615 = vmatpush1.bf16.msra.mxu0 %v550
        %616 = vmatprep.subr.bf16.mxu0 %v553
        %617 = vmatpush1.bf16.msra.mxu0 %v552
        %618 = vmatprep.subr.bf16.mxu0 %v555
        %619 = vmatpush1.bf16.msra.mxu0 %v554
        %620 = vmatprep.subr.bf16.mxu0 %v557
        %621 = vmatpush1.bf16.msra.mxu0 %v556
        %622 = vmatprep.subr.bf16.mxu0 %v559
        %623 = vmatpush1.bf16.msra.mxu0 %v558
        %624 = vmatprep.subr.bf16.mxu0 %v561
        %625 = vmatpush1.bf16.msra.mxu0 %v560
        %626 = vmatprep.subr.bf16.mxu0 %v563
        %627 = vmatpush1.bf16.msra.mxu0 %v562
        %628 = vmatprep.subr.bf16.mxu0 %v565
        %629 = vmatpush1.bf16.msra.mxu0 %v564
        %630 = vmatprep.subr.bf16.mxu0 %v567
        %631 = vmatpush1.bf16.msra.mxu0 %v566
        %632 = vmatprep.subr.bf16.mxu0 %v569
        %633 = vmatpush1.bf16.msra.mxu0 %v568
        %634 = vmatprep.subr.bf16.mxu0 %v571
        %635 = vmatpush1.bf16.msra.mxu0 %v570
        %636 = vmatprep.subr.bf16.mxu0 %v573
        %637 = vmatpush1.bf16.msra.mxu0 %v572
        %638 = vmatprep.subr.bf16.mxu0 %v575
        %639 = vmatpush1.bf16.msra.mxu0 %v574
        %640 = vmatprep.subr.bf16.mxu0 %v577
        %641 = vmatpush1.bf16.msra.mxu0 %v576
        %642 = vmatprep.subr.bf16.mxu0 %v579
        %643 = vmatpush1.bf16.msra.mxu0 %v578
        %644 = vmatprep.subr.bf16.mxu0 %v581
        %645 = vmatpush1.bf16.msra.mxu0 %v580
        %646 = vmatprep.mubr.bf16.mxu0 %v180
        %647 = vmatmul.mubr.bf16.gmra.mrb[0].mxu0 %v179
        %v648 = vpop.f32.mrb[0].mxu0
        %v649 = vadd.f32 0.0, %v648
        %v650 = vpop.f32.mrb[0].mxu0
        %v651 = vadd.f32 0.0, %v650
        %v652 = vpop.f32.mrb[0].mxu0
        %v653 = vpop.f32.mrb[0].mxu0
        %654 = vdwg.mxu0
        %v655 = vtanh.pop %v649
        %v656 = vtanh.pop %v651
        %v657 = vmul.f32 %v177, %v655
        %v658 = vmul.f32 %v178, %v656
        %v659 = vadd.f32 %v657, %v177
        %v660 = vadd.f32 %v658, %v178
        %s661 = scalar_lea.vmem %s174, 16 [#allocation7]
        %662 = vst [vmem:[%s661] sm:$0xff] %v659
        %663 = vst [vmem:[%s661 + $0x8] sm:$0xff] %v660
        %v664 = vld [vmem:[#allocation5 + $0x10] sm:$0xff]
        %v665 = vld [vmem:[#allocation5 + $0x30] sm:$0xff]
        %v666 = vld [vmem:[#allocation5 + $0x50] sm:$0xff]
        %v667 = vld [vmem:[#allocation5 + $0x70] sm:$0xff]
        %v668 = vld [vmem:[#allocation5 + $0x90] sm:$0xff]
        %v669 = vld [vmem:[#allocation5 + $0xb0] sm:$0xff]
        %v670 = vld [vmem:[#allocation5 + $0xd0] sm:$0xff]
        %v671 = vld [vmem:[#allocation5 + $0xf0] sm:$0xff]
        %v672 = vld [vmem:[#allocation5 + $0x110] sm:$0xff]
        %v673 = vld [vmem:[#allocation5 + $0x130] sm:$0xff]
        %v674 = vld [vmem:[#allocation5 + $0x150] sm:$0xff]
        %v675 = vld [vmem:[#allocation5 + $0x170] sm:$0xff]
        %v676 = vld [vmem:[#allocation5 + $0x190] sm:$0xff]
        %v677 = vld [vmem:[#allocation5 + $0x1b0] sm:$0xff]
        %v678 = vld [vmem:[#allocation5 + $0x1d0] sm:$0xff]
        %v679 = vld [vmem:[#allocation5 + $0x1f0] sm:$0xff]
        %v680 = vld [vmem:[#allocation5 + $0x210] sm:$0xff]
        %v681 = vld [vmem:[#allocation5 + $0x230] sm:$0xff]
        %v682 = vld [vmem:[#allocation5 + $0x250] sm:$0xff]
        %v683 = vld [vmem:[#allocation5 + $0x270] sm:$0xff]
        %v684 = vld [vmem:[#allocation5 + $0x290] sm:$0xff]
        %v685 = vld [vmem:[#allocation5 + $0x2b0] sm:$0xff]
        %v686 = vld [vmem:[#allocation5 + $0x2d0] sm:$0xff]
        %v687 = vld [vmem:[#allocation5 + $0x2f0] sm:$0xff]
        %v688 = vld [vmem:[#allocation5 + $0x310] sm:$0xff]
        %v689 = vld [vmem:[#allocation5 + $0x330] sm:$0xff]
        %v690 = vld [vmem:[#allocation5 + $0x350] sm:$0xff]
        %v691 = vld [vmem:[#allocation5 + $0x370] sm:$0xff]
        %v692 = vld [vmem:[#allocation5 + $0x390] sm:$0xff]
        %v693 = vld [vmem:[#allocation5 + $0x3b0] sm:$0xff]
        %v694 = vld [vmem:[#allocation5 + $0x3d0] sm:$0xff]
        %v695 = vld [vmem:[#allocation5 + $0x3f0] sm:$0xff]
        %v728 = vunpack.c.l.b16 %v664
        %v729 = vunpack.c.h.b16 %v664
        %v730 = vunpack.c.l.b16 %v665
        %v731 = vunpack.c.h.b16 %v665
        %v732 = vunpack.c.l.b16 %v666
        %v733 = vunpack.c.h.b16 %v666
        %v734 = vunpack.c.l.b16 %v667
        %v735 = vunpack.c.h.b16 %v667
        %v736 = vunpack.c.l.b16 %v668
        %v737 = vunpack.c.h.b16 %v668
        %v738 = vunpack.c.l.b16 %v669
        %v739 = vunpack.c.h.b16 %v669
        %v740 = vunpack.c.l.b16 %v670
        %v741 = vunpack.c.h.b16 %v670
        %v742 = vunpack.c.l.b16 %v671
        %v743 = vunpack.c.h.b16 %v671
        %v744 = vunpack.c.l.b16 %v672
        %v745 = vunpack.c.h.b16 %v672
        %v746 = vunpack.c.l.b16 %v673
        %v747 = vunpack.c.h.b16 %v673
        %v748 = vunpack.c.l.b16 %v674
        %v749 = vunpack.c.h.b16 %v674
        %v750 = vunpack.c.l.b16 %v675
        %v751 = vunpack.c.h.b16 %v675
        %v752 = vunpack.c.l.b16 %v676
        %v753 = vunpack.c.h.b16 %v676
        %v754 = vunpack.c.l.b16 %v677
        %v755 = vunpack.c.h.b16 %v677
        %v756 = vunpack.c.l.b16 %v678
        %v757 = vunpack.c.h.b16 %v678
        %v758 = vunpack.c.l.b16 %v679
        %v759 = vunpack.c.h.b16 %v679
        %v760 = vunpack.c.l.b16 %v680
        %v761 = vunpack.c.h.b16 %v680
        %v762 = vunpack.c.l.b16 %v681
        %v763 = vunpack.c.h.b16 %v681
        %v764 = vunpack.c.l.b16 %v682
        %v765 = vunpack.c.h.b16 %v682
        %v766 = vunpack.c.l.b16 %v683
        %v767 = vunpack.c.h.b16 %v683
        %v768 = vunpack.c.l.b16 %v684
        %v769 = vunpack.c.h.b16 %v684
        %v770 = vunpack.c.l.b16 %v685
        %v771 = vunpack.c.h.b16 %v685
        %v772 = vunpack.c.l.b16 %v686
        %v773 = vunpack.c.h.b16 %v686
        %v774 = vunpack.c.l.b16 %v687
        %v775 = vunpack.c.h.b16 %v687
        %v776 = vunpack.c.l.b16 %v688
        %v777 = vunpack.c.h.b16 %v688
        %v778 = vunpack.c.l.b16 %v689
        %v779 = vunpack.c.h.b16 %v689
        %v780 = vunpack.c.l.b16 %v690
        %v781 = vunpack.c.h.b16 %v690
        %v782 = vunpack.c.l.b16 %v691
        %v783 = vunpack.c.h.b16 %v691
        %v784 = vunpack.c.l.b16 %v692
        %v785 = vunpack.c.h.b16 %v692
        %v786 = vunpack.c.l.b16 %v693
        %v787 = vunpack.c.h.b16 %v693
        %v788 = vunpack.c.l.b16 %v694
        %v789 = vunpack.c.h.b16 %v694
        %v790 = vunpack.c.l.b16 %v695
        %v791 = vunpack.c.h.b16 %v695
        %v792 = vpack.c.b16 %v730, %v728
        %v793 = vpack.c.b16 %v731, %v729
        %v794 = vpack.c.b16 %v734, %v732
        %v795 = vpack.c.b16 %v735, %v733
        %v796 = vpack.c.b16 %v738, %v736
        %v797 = vpack.c.b16 %v739, %v737
        %v798 = vpack.c.b16 %v742, %v740
        %v799 = vpack.c.b16 %v743, %v741
        %v800 = vpack.c.b16 %v746, %v744
        %v801 = vpack.c.b16 %v747, %v745
        %v802 = vpack.c.b16 %v750, %v748
        %v803 = vpack.c.b16 %v751, %v749
        %v804 = vpack.c.b16 %v754, %v752
        %v805 = vpack.c.b16 %v755, %v753
        %v806 = vpack.c.b16 %v758, %v756
        %v807 = vpack.c.b16 %v759, %v757
        %v808 = vpack.c.b16 %v762, %v760
        %v809 = vpack.c.b16 %v763, %v761
        %v810 = vpack.c.b16 %v766, %v764
        %v811 = vpack.c.b16 %v767, %v765
        %v812 = vpack.c.b16 %v770, %v768
        %v813 = vpack.c.b16 %v771, %v769
        %v814 = vpack.c.b16 %v774, %v772
        %v815 = vpack.c.b16 %v775, %v773
        %v816 = vpack.c.b16 %v778, %v776
        %v817 = vpack.c.b16 %v779, %v777
        %v818 = vpack.c.b16 %v782, %v780
        %v819 = vpack.c.b16 %v783, %v781
        %v820 = vpack.c.b16 %v786, %v784
        %v821 = vpack.c.b16 %v787, %v785
        %v822 = vpack.c.b16 %v790, %v788
        %v823 = vpack.c.b16 %v791, %v789
        %856 = vmatprep.subr.bf16.mxu0 %v793
        %857 = vmatpush1.bf16.msra.mxu0 %v792
        %858 = vmatprep.subr.bf16.mxu0 %v795
        %859 = vmatpush1.bf16.msra.mxu0 %v794
        %860 = vmatprep.subr.bf16.mxu0 %v797
        %861 = vmatpush1.bf16.msra.mxu0 %v796
        %862 = vmatprep.subr.bf16.mxu0 %v799
        %863 = vmatpush1.bf16.msra.mxu0 %v798
        %864 = vmatprep.subr.bf16.mxu0 %v801
        %865 = vmatpush1.bf16.msra.mxu0 %v800
        %866 = vmatprep.subr.bf16.mxu0 %v803
        %867 = vmatpush1.bf16.msra.mxu0 %v802
        %868 = vmatprep.subr.bf16.mxu0 %v805
        %869 = vmatpush1.bf16.msra.mxu0 %v804
        %870 = vmatprep.subr.bf16.mxu0 %v807
        %871 = vmatpush1.bf16.msra.mxu0 %v806
        %872 = vmatprep.subr.bf16.mxu0 %v809
        %873 = vmatpush1.bf16.msra.mxu0 %v808
        %874 = vmatprep.subr.bf16.mxu0 %v811
        %875 = vmatpush1.bf16.msra.mxu0 %v810
        %876 = vmatprep.subr.bf16.mxu0 %v813
        %877 = vmatpush1.bf16.msra.mxu0 %v812
        %878 = vmatprep.subr.bf16.mxu0 %v815
        %879 = vmatpush1.bf16.msra.mxu0 %v814
        %880 = vmatprep.subr.bf16.mxu0 %v817
        %881 = vmatpush1.bf16.msra.mxu0 %v816
        %882 = vmatprep.subr.bf16.mxu0 %v819
        %883 = vmatpush1.bf16.msra.mxu0 %v818
        %884 = vmatprep.subr.bf16.mxu0 %v821
        %885 = vmatpush1.bf16.msra.mxu0 %v820
        %886 = vmatprep.subr.bf16.mxu0 %v823
        %887 = vmatpush1.bf16.msra.mxu0 %v822
        %888 = vmatprep.mubr.bf16.mxu0 %v180
        %889 = vmatmul.mubr.bf16.gmra.mrb[0].mxu0 %v179
        %v890 = vpop.f32.mrb[0].mxu0
        %v891 = vadd.f32 0.0, %v890
        %v892 = vpop.f32.mrb[0].mxu0
        %v893 = vadd.f32 0.0, %v892
        %v894 = vpop.f32.mrb[0].mxu0
        %v895 = vpop.f32.mrb[0].mxu0
        %896 = vdwg.mxu0
        %v897 = vtanh.pop %v891
        %v898 = vtanh.pop %v893
        %v899 = vmul.f32 %v177, %v897
        %v900 = vmul.f32 %v178, %v898
        %v901 = vadd.f32 %v899, %v177
        %v902 = vadd.f32 %v900, %v178
        %s903 = scalar_lea.vmem %s174, 32 [#allocation7]
        %904 = vst [vmem:[%s903] sm:$0xff] %v901
        %905 = vst [vmem:[%s903 + $0x8] sm:$0xff] %v902
        %v906 = vld [vmem:[#allocation5 + $0x18] sm:$0xff]
        %v907 = vld [vmem:[#allocation5 + $0x38] sm:$0xff]
        %v908 = vld [vmem:[#allocation5 + $0x58] sm:$0xff]
        %v909 = vld [vmem:[#allocation5 + $0x78] sm:$0xff]
        %v910 = vld [vmem:[#allocation5 + $0x98] sm:$0xff]
        %v911 = vld [vmem:[#allocation5 + $0xb8] sm:$0xff]
        %v912 = vld [vmem:[#allocation5 + $0xd8] sm:$0xff]
        %v913 = vld [vmem:[#allocation5 + $0xf8] sm:$0xff]
        %v914 = vld [vmem:[#allocation5 + $0x118] sm:$0xff]
        %v915 = vld [vmem:[#allocation5 + $0x138] sm:$0xff]
        %v916 = vld [vmem:[#allocation5 + $0x158] sm:$0xff]
        %v917 = vld [vmem:[#allocation5 + $0x178] sm:$0xff]
        %v918 = vld [vmem:[#allocation5 + $0x198] sm:$0xff]
        %v919 = vld [vmem:[#allocation5 + $0x1b8] sm:$0xff]
        %v920 = vld [vmem:[#allocation5 + $0x1d8] sm:$0xff]
        %v921 = vld [vmem:[#allocation5 + $0x1f8] sm:$0xff]
        %v922 = vld [vmem:[#allocation5 + $0x218] sm:$0xff]
        %v923 = vld [vmem:[#allocation5 + $0x238] sm:$0xff]
        %v924 = vld [vmem:[#allocation5 + $0x258] sm:$0xff]
        %v925 = vld [vmem:[#allocation5 + $0x278] sm:$0xff]
        %v926 = vld [vmem:[#allocation5 + $0x298] sm:$0xff]
        %v927 = vld [vmem:[#allocation5 + $0x2b8] sm:$0xff]
        %v928 = vld [vmem:[#allocation5 + $0x2d8] sm:$0xff]
        %v929 = vld [vmem:[#allocation5 + $0x2f8] sm:$0xff]
        %v930 = vld [vmem:[#allocation5 + $0x318] sm:$0xff]
        %v931 = vld [vmem:[#allocation5 + $0x338] sm:$0xff]
        %v932 = vld [vmem:[#allocation5 + $0x358] sm:$0xff]
        %v933 = vld [vmem:[#allocation5 + $0x378] sm:$0xff]
        %v934 = vld [vmem:[#allocation5 + $0x398] sm:$0xff]
        %v935 = vld [vmem:[#allocation5 + $0x3b8] sm:$0xff]
        %v936 = vld [vmem:[#allocation5 + $0x3d8] sm:$0xff]
        %v937 = vld [vmem:[#allocation5 + $0x3f8] sm:$0xff]
        %v970 = vunpack.c.l.b16 %v906
        %v971 = vunpack.c.h.b16 %v906
        %v972 = vunpack.c.l.b16 %v907
        %v973 = vunpack.c.h.b16 %v907
        %v974 = vunpack.c.l.b16 %v908
        %v975 = vunpack.c.h.b16 %v908
        %v976 = vunpack.c.l.b16 %v909
        %v977 = vunpack.c.h.b16 %v909
        %v978 = vunpack.c.l.b16 %v910
        %v979 = vunpack.c.h.b16 %v910
        %v980 = vunpack.c.l.b16 %v911
        %v981 = vunpack.c.h.b16 %v911
        %v982 = vunpack.c.l.b16 %v912
        %v983 = vunpack.c.h.b16 %v912
        %v984 = vunpack.c.l.b16 %v913
        %v985 = vunpack.c.h.b16 %v913
        %v986 = vunpack.c.l.b16 %v914
        %v987 = vunpack.c.h.b16 %v914
        %v988 = vunpack.c.l.b16 %v915
        %v989 = vunpack.c.h.b16 %v915
        %v990 = vunpack.c.l.b16 %v916
        %v991 = vunpack.c.h.b16 %v916
        %v992 = vunpack.c.l.b16 %v917
        %v993 = vunpack.c.h.b16 %v917
        %v994 = vunpack.c.l.b16 %v918
        %v995 = vunpack.c.h.b16 %v918
        %v996 = vunpack.c.l.b16 %v919
        %v997 = vunpack.c.h.b16 %v919
        %v998 = vunpack.c.l.b16 %v920
        %v999 = vunpack.c.h.b16 %v920
        %v1000 = vunpack.c.l.b16 %v921
        %v1001 = vunpack.c.h.b16 %v921
        %v1002 = vunpack.c.l.b16 %v922
        %v1003 = vunpack.c.h.b16 %v922
        %v1004 = vunpack.c.l.b16 %v923
        %v1005 = vunpack.c.h.b16 %v923
        %v1006 = vunpack.c.l.b16 %v924
        %v1007 = vunpack.c.h.b16 %v924
        %v1008 = vunpack.c.l.b16 %v925
        %v1009 = vunpack.c.h.b16 %v925
        %v1010 = vunpack.c.l.b16 %v926
        %v1011 = vunpack.c.h.b16 %v926
        %v1012 = vunpack.c.l.b16 %v927
        %v1013 = vunpack.c.h.b16 %v927
        %v1014 = vunpack.c.l.b16 %v928
        %v1015 = vunpack.c.h.b16 %v928
        %v1016 = vunpack.c.l.b16 %v929
        %v1017 = vunpack.c.h.b16 %v929
        %v1018 = vunpack.c.l.b16 %v930
        %v1019 = vunpack.c.h.b16 %v930
        %v1020 = vunpack.c.l.b16 %v931
        %v1021 = vunpack.c.h.b16 %v931
        %v1022 = vunpack.c.l.b16 %v932
        %v1023 = vunpack.c.h.b16 %v932
        %v1024 = vunpack.c.l.b16 %v933
        %v1025 = vunpack.c.h.b16 %v933
        %v1026 = vunpack.c.l.b16 %v934
        %v1027 = vunpack.c.h.b16 %v934
        %v1028 = vunpack.c.l.b16 %v935
        %v1029 = vunpack.c.h.b16 %v935
        %v1030 = vunpack.c.l.b16 %v936
        %v1031 = vunpack.c.h.b16 %v936
        %v1032 = vunpack.c.l.b16 %v937
        %v1033 = vunpack.c.h.b16 %v937
        %v1034 = vpack.c.b16 %v972, %v970
        %v1035 = vpack.c.b16 %v973, %v971
        %v1036 = vpack.c.b16 %v976, %v974
        %v1037 = vpack.c.b16 %v977, %v975
        %v1038 = vpack.c.b16 %v980, %v978
        %v1039 = vpack.c.b16 %v981, %v979
        %v1040 = vpack.c.b16 %v984, %v982
        %v1041 = vpack.c.b16 %v985, %v983
        %v1042 = vpack.c.b16 %v988, %v986
        %v1043 = vpack.c.b16 %v989, %v987
        %v1044 = vpack.c.b16 %v992, %v990
        %v1045 = vpack.c.b16 %v993, %v991
        %v1046 = vpack.c.b16 %v996, %v994
        %v1047 = vpack.c.b16 %v997, %v995
        %v1048 = vpack.c.b16 %v1000, %v998
        %v1049 = vpack.c.b16 %v1001, %v999
        %v1050 = vpack.c.b16 %v1004, %v1002
        %v1051 = vpack.c.b16 %v1005, %v1003
        %v1052 = vpack.c.b16 %v1008, %v1006
        %v1053 = vpack.c.b16 %v1009, %v1007
        %v1054 = vpack.c.b16 %v1012, %v1010
        %v1055 = vpack.c.b16 %v1013, %v1011
        %v1056 = vpack.c.b16 %v1016, %v1014
        %v1057 = vpack.c.b16 %v1017, %v1015
        %v1058 = vpack.c.b16 %v1020, %v1018
        %v1059 = vpack.c.b16 %v1021, %v1019
        %v1060 = vpack.c.b16 %v1024, %v1022
        %v1061 = vpack.c.b16 %v1025, %v1023
        %v1062 = vpack.c.b16 %v1028, %v1026
        %v1063 = vpack.c.b16 %v1029, %v1027
        %v1064 = vpack.c.b16 %v1032, %v1030
        %v1065 = vpack.c.b16 %v1033, %v1031
        %1098 = vmatprep.subr.bf16.mxu0 %v1035
        %1099 = vmatpush1.bf16.msra.mxu0 %v1034
        %1100 = vmatprep.subr.bf16.mxu0 %v1037
        %1101 = vmatpush1.bf16.msra.mxu0 %v1036
        %1102 = vmatprep.subr.bf16.mxu0 %v1039
        %1103 = vmatpush1.bf16.msra.mxu0 %v1038
        %1104 = vmatprep.subr.bf16.mxu0 %v1041
        %1105 = vmatpush1.bf16.msra.mxu0 %v1040
        %1106 = vmatprep.subr.bf16.mxu0 %v1043
        %1107 = vmatpush1.bf16.msra.mxu0 %v1042
        %1108 = vmatprep.subr.bf16.mxu0 %v1045
        %1109 = vmatpush1.bf16.msra.mxu0 %v1044
        %1110 = vmatprep.subr.bf16.mxu0 %v1047
        %1111 = vmatpush1.bf16.msra.mxu0 %v1046
        %1112 = vmatprep.subr.bf16.mxu0 %v1049
        %1113 = vmatpush1.bf16.msra.mxu0 %v1048
        %1114 = vmatprep.subr.bf16.mxu0 %v1051
        %1115 = vmatpush1.bf16.msra.mxu0 %v1050
        %1116 = vmatprep.subr.bf16.mxu0 %v1053
        %1117 = vmatpush1.bf16.msra.mxu0 %v1052
        %1118 = vmatprep.subr.bf16.mxu0 %v1055
        %1119 = vmatpush1.bf16.msra.mxu0 %v1054
        %1120 = vmatprep.subr.bf16.mxu0 %v1057
        %1121 = vmatpush1.bf16.msra.mxu0 %v1056
        %1122 = vmatprep.subr.bf16.mxu0 %v1059
        %1123 = vmatpush1.bf16.msra.mxu0 %v1058
        %1124 = vmatprep.subr.bf16.mxu0 %v1061
        %1125 = vmatpush1.bf16.msra.mxu0 %v1060
        %1126 = vmatprep.subr.bf16.mxu0 %v1063
        %1127 = vmatpush1.bf16.msra.mxu0 %v1062
        %1128 = vmatprep.subr.bf16.mxu0 %v1065
        %1129 = vmatpush1.bf16.msra.mxu0 %v1064
        %1130 = vmatprep.mubr.bf16.mxu0 %v180
        %1131 = vmatmul.mubr.bf16.gmra.mrb[0].mxu0 %v179
        %v1132 = vpop.f32.mrb[0].mxu0
        %v1133 = vadd.f32 0.0, %v1132
        %v1134 = vpop.f32.mrb[0].mxu0
        %v1135 = vadd.f32 0.0, %v1134
        %v1136 = vpop.f32.mrb[0].mxu0
        %v1137 = vpop.f32.mrb[0].mxu0
        %1138 = vdwg.mxu0
        %v1139 = vtanh.pop %v1133
        %v1140 = vtanh.pop %v1135
        %v1141 = vmul.f32 %v177, %v1139
        %v1142 = vmul.f32 %v178, %v1140
        %v1143 = vadd.f32 %v1141, %v177
        %v1144 = vadd.f32 %v1142, %v178
        %s1145 = scalar_lea.vmem %s174, 48 [#allocation7]
        %1146 = vst [vmem:[%s1145] sm:$0xff] %v1143
        %1147 = vst [vmem:[%s1145 + $0x8] sm:$0xff] %v1144
        %s1148 = sand.u32 %s75, 1
        %s1149 = scalar_lea.sflag [#allocation4], %s1148
        %s1150 = sand.u32 %s75, 1
        %s1151 = smul.addr %s1150, 64
        %s1152 = scalar_lea.vmem [#allocation7], %s1151
        // Predicated region
        $region37: #{tpu_custom_call.1} parent=27 // pred_check
          %p1153 = pneg %p85
        $region38: #{tpu_custom_call.1} parent=27 // pred_check_branch
          %1155 = sbr.rel (%p1153) target = $region40
        $region39: #{tpu_custom_call.1} parent=27 // pred_region
          %s1157 = ssub.s32 1024, 1024
          %1158 = vsyncadd %s1149, %s1157
          %s1159 = smul.addr %s20, 8
          %s1160 = smul.addr %s1159, 128
          %s1161 = scalar_lea.hbm %s2, %s1160
          %s1162 = sshll.u32 %s1152, 4
          %s1163 = int_to_ptr.vmem [resolvable:$true] %s1162
          %1168 = dma.vmem_to_hbm [thread:$0]  %s1163, 1024, %s1161, %s1149, 256, 256, 16
        $region40: #{tpu_custom_call.1} parent=27 // pred_fallthru
          _
      $region28: #{tpu_custom_call.1} parent=5 // pred_fallthru
        _
      %p1169 = scmp.le.s32.totalorder 2, %s15
      // Predicated region
      $region41: #{tpu_custom_call.1} parent=5 // pred_check
        %p1170 = pneg %p1169
      $region42: #{tpu_custom_call.1} parent=5 // pred_check_branch
        %1172 = sbr.rel (%p1170) target = $region44
      $region43: #{tpu_custom_call.1} parent=5 // pred_region
        %s1173 = ssub.s32 %s15, 2
        // Predicated region
        $region45: #{tpu_custom_call.1} parent=43 // pred_check
          %p1174 = pneg %p91
        $region46: #{tpu_custom_call.1} parent=43 // pred_check_branch
          %1176 = sbr.rel (%p1174) target = $region48
        $region47: #{tpu_custom_call.1} parent=43 // pred_region
          %s1177 = sand.u32 %s76, 1
          %s1178 = scalar_lea.sflag [#allocation4], %s1177
          %s1179 = sand.u32 %s76, 1
          %s1180 = smul.addr %s1179, 64
          %s1181 = scalar_lea.vmem [#allocation7], %s1180
          %1182 = dma.done %s1178, 1024
        $region48: #{tpu_custom_call.1} parent=43 // pred_fallthru
          _
      $region44: #{tpu_custom_call.1} parent=5 // pred_fallthru
        _
    $region6: #{tpu_custom_call.1} parent=1 // loop_footer
      %s19 = sadd.s32 1, %s15
    $region7: #{tpu_custom_call.1} parent=1 // loop_footer_branch
      %14 = sbr.rel target = $region3
    $region8: #{tpu_custom_call.1} parent=1 // loop_exit
      _
    %1183 = vsyncpa [#allocation3], 1
    %s1184 = scalar_lea.sflag [#allocation3], 1
    %1185 = vsyncpa %s1184, 1
    %1186 = vsyncpa [#allocation6], 1
    %1187 = vsyncpa [#allocation4], 1
    %s1188 = scalar_lea.sflag [#allocation4], 1
    %1189 = vsyncpa %s1188, 1

// kernel: tpu_custom_call.1
$region0: #{tpu_custom_call.1}
  #allocation0 [shape = 'u32[]', space=smem, size = 0x4, offset = 0x4, fixed_abs, tag = 'smem constant byte address 0x4 - core index']
  #allocation1 [shape = 'u32[144,128]{1,0:T(1,128)}', space=vmem, size = 0x12000, scoped, tag = 'internal scratch']
  %s0 = inlined_call_operand.hbm [shape: f32[16,256], index: 0, kind: input, shape index: {}]
  %s1 = inlined_call_operand.hbm [shape: bf16[256,1024], index: 1, kind: input, shape index: {}]
  %s2 = inlined_call_operand.hbm [shape: f32[2,4,8,256], index: 2, kind: output, shape index: {}]
  %s3 = sld [smem:[#allocation0]]
  $region49: #{tpu_custom_call.1} parent=0
    _
  %s5 = ssub.s32 1, %s3
  %s6 = scalar_select 0, %s5, %s3
  $region1: #{tpu_custom_call.1} parent=0
    #allocation2 [shape = 'u8[16384]{0}', space=vmem, size = 0x4000, scoped, tag = 'input window, operand 0']
    #allocation3 [shape = 's32[2]{0}', space=sflag, size = 0x8, scoped, tag = 'scoped memory for tpu_custom_call.1']
    #allocation4 [shape = 's32[2]{0}', space=sflag, size = 0x8, scoped, tag = 'scoped memory for tpu_custom_call.1']
    #allocation5 [shape = 'u8[524288]{0}', space=vmem, size = 0x80000, scoped, tag = 'input window, operand 1, single buffered']
    #allocation6 [shape = 's32[1]{0}', space=sflag, size = 0x4, scoped, tag = 'scoped memory for tpu_custom_call.1']
    #allocation7 [shape = 'u8[65536]{0}', space=vmem, size = 0x10000, scoped, tag = 'output window, operand 0']
    %7 = vsyncpa [#allocation3], 0
    %s8 = scalar_lea.sflag [#allocation3], 1
    %9 = vsyncpa %s8, 0
    %10 = vsyncpa [#allocation6], 0
    %11 = vsyncpa [#allocation4], 0
    %s12 = scalar_lea.sflag [#allocation4], 1
    %13 = vsyncpa %s12, 0
    loop: start=0, step=1, limit=4
    $region2: #{tpu_custom_call.1} parent=1 // loop_pre_header
      _
    $region3: #{tpu_custom_call.1} parent=1 // loop_header
      %s15 = sphi 0, %s19
      %p16 = scmp.ge.s32.totalorder %s15, 4
      %s25 = sphi 0, %s27
      %s28 = sphi 0, %s25
      %s29 = sphi 0, %s28
      %s45 = sphi 0, %s29
      %s49 = sphi 0, %s49
      %s51 = sphi 0, %s49
      %s52 = sphi 0, %s51
      %s66 = sphi 0, %s52
      %s72 = sphi 0, %s74
      %s75 = sphi 0, %s72
      %s76 = sphi 0, %s75
      %s92 = sphi 0, %s76
    $region4: #{tpu_custom_call.1} parent=1 // loop_header_branch
      %18 = sbr.rel (%p16) target = $region8
    $region5: #{tpu_custom_call.1} parent=1 // loop_body
      %s20 = ssub.s32 %s15, 1
      %s21 = ssub.s32 %s15, 2
      %s22 = sadd.s32 %s15, 1
      %s23 = ssub.s32 %s15, %s22
      %p24 = scmp.eq.s32.totalorder %s23, 0
      %s26 = sadd.s32 %s25, 1
      %s27 = scalar_select %p24, %s25, %s26
      %p30 = pneg %p24
      %p31 = scmp.eq.s32.totalorder %s15, 1
      %p32 = por %p30, %p31
      %p33 = scmp.ne.s32.totalorder %s25, %s28
      %p34 = scmp.eq.s32.totalorder %s15, 0
      %p35 = por %p33, %p34
      %p36 = scmp.ne.s32.totalorder %s25, %s28
      %p37 = scmp.eq.s32.totalorder %s20, 1
      %p38 = por %p36, %p37
      %p39 = scmp.ne.s32.totalorder %s28, %s29
      %p40 = scmp.eq.s32.totalorder %s20, 0
      %p41 = por %p39, %p40
      %p42 = scmp.ne.s32.totalorder %s28, %s29
      %p43 = scmp.eq.s32.totalorder %s21, 1
      %p44 = por %p42, %p43
      %p46 = scmp.ne.s32.totalorder %s29, %s45
      %p47 = scmp.eq.s32.totalorder %s21, 0
      %p48 = por %p46, %p47
      %s50 = sadd.s32 %s49, 1
      %p53 = scmp.eq.s32.totalorder %s15, 1
      %p54 = scmp.ne.s32.totalorder %s49, %s51
      %p55 = scmp.eq.s32.totalorder %s15, 0
      %p56 = por %p54, %p55
      %p57 = scmp.ne.s32.totalorder %s49, %s51
      %p58 = scmp.eq.s32.totalorder %s20, 1
      %p59 = por %p57, %p58
      %p60 = scmp.ne.s32.totalorder %s51, %s52
      %p61 = scmp.eq.s32.totalorder %s20, 0
      %p62 = por %p60, %p61
      %p63 = scmp.ne.s32.totalorder %s51, %s52
      %p64 = scmp.eq.s32.totalorder %s21, 1
      %p65 = por %p63, %p64
      %p67 = scmp.ne.s32.totalorder %s52, %s66
      %p68 = scmp.eq.s32.totalorder %s21, 0
      %p69 = por %p67, %p68
      %s70 = ssub.s32 %s15, %s22
      %p71 = scmp.eq.s32.totalorder %s70, 0
      %s73 = sadd.s32 %s72, 1
      %s74 = scalar_select %p71, %s72, %s73
      %p77 = pneg %p71
      %p78 = scmp.eq.s32.totalorder %s15, 1
      %p79 = por %p77, %p78
      %p80 = scmp.ne.s32.totalorder %s72, %s75
      %p81 = scmp.eq.s32.totalorder %s15, 0
      %p82 = por %p80, %p81
      %p83 = scmp.ne.s32.totalorder %s72, %s75
      %p84 = scmp.eq.s32.totalorder %s20, 1
      %p85 = por %p83, %p84
      %p86 = scmp.ne.s32.totalorder %s75, %s76
      %p87 = scmp.eq.s32.totalorder %s20, 0
      %p88 = por %p86, %p87
      %p89 = scmp.ne.s32.totalorder %s75, %s76
      %p90 = scmp.eq.s32.totalorder %s21, 1
      %p91 = por %p89, %p90
      %p93 = scmp.ne.s32.totalorder %s76, %s92
      %p94 = scmp.eq.s32.totalorder %s21, 0
      %p95 = por %p93, %p94
      %p96 = scmp.le.s32.totalorder 1, %s15
      %p97 = scmp.lt.s32.totalorder %s15, 3
      %p98 = pnand %p96, %p97
      %p99 = pneg %p98
      // Predicated region
      $region9: #{tpu_custom_call.1} parent=5 // pred_check
        _
      $region10: #{tpu_custom_call.1} parent=5 // pred_check_branch
        %101 = sbr.rel (%p98) target = $region12
      $region11: #{tpu_custom_call.1} parent=5 // pred_region
        %s102 = ssub.s32 %s15, 1
        // Predicated region
        $region13: #{tpu_custom_call.1} parent=11 // pred_check
          %p103 = pneg %p62
        $region14: #{tpu_custom_call.1} parent=11 // pred_check_branch
          %105 = sbr.rel (%p103) target = $region16
        $region15: #{tpu_custom_call.1} parent=11 // pred_region
          %s107 = ssub.s32 16384, 16384
          %108 = vsyncadd [#allocation6], %s107
          %s109 = sshll.u32 [#allocation5], 4
          %s110 = int_to_ptr.vmem [resolvable:$true] %s109
          %115 = dma.hbm_to_vmem [thread:$0]  %s1, 16384, %s110, [#allocation6], 512, 512, 32
        $region16: #{tpu_custom_call.1} parent=11 // pred_fallthru
          _
      $region12: #{tpu_custom_call.1} parent=5 // pred_fallthru
        _
      %p116 = scmp.lt.s32.totalorder %s15, 2
      // Predicated region
      $region17: #{tpu_custom_call.1} parent=5 // pred_check
        %p117 = pneg %p116
      $region18: #{tpu_custom_call.1} parent=5 // pred_check_branch
        %119 = sbr.rel (%p117) target = $region20
      $region19: #{tpu_custom_call.1} parent=5 // pred_region
        // Predicated region
        $region21: #{tpu_custom_call.1} parent=19 // pred_check
          %p120 = pneg %p35
        $region22: #{tpu_custom_call.1} parent=19 // pred_check_branch
          %122 = sbr.rel (%p120) target = $region24
        $region23: #{tpu_custom_call.1} parent=19 // pred_region
          %s123 = sand.u32 %s25, 1
          %s124 = scalar_lea.sflag [#allocation3], %s123
          %s125 = sand.u32 %s25, 1
          %s126 = smul.addr %s125, 16
          %s127 = scalar_lea.vmem [#allocation2], %s126
          %s129 = ssub.s32 256, 256
          %130 = vsyncadd %s124, %s129
          %s131 = smul.addr %s15, 2
          %s132 = smul.addr %s131, 128
          %s133 = scalar_lea.hbm %s0, %s132
          %s135 = sshll.u32 %s127, 4
          %s136 = int_to_ptr.vmem [resolvable:$true] %s135
          %138 = dma.hbm_to_vmem [thread:$0]  %s133, 256, %s136, %s124
        $region24: #{tpu_custom_call.1} parent=19 // pred_fallthru
          _
      $region20: #{tpu_custom_call.1} parent=5 // pred_fallthru
        _
      %p139 = scmp.le.s32.totalorder 1, %s15
      %p140 = scmp.lt.s32.totalorder %s15, 3
      %p141 = pnand %p139, %p140
      %p142 = pneg %p141
      // Predicated region
      $region25: #{tpu_custom_call.1} parent=5 // pred_check
        _
      $region26: #{tpu_custom_call.1} parent=5 // pred_check_branch
        %144 = sbr.rel (%p141) target = $region28
      $region27: #{tpu_custom_call.1} parent=5 // pred_region
        %s145 = ssub.s32 %s15, 1
        %s146 = sand.u32 %s28, 1
        %s147 = scalar_lea.sflag [#allocation3], %s146
        %s148 = sand.u32 %s28, 1
        %s149 = smul.addr %s148, 16
        %s150 = scalar_lea.vmem [#allocation2], %s149
        // Predicated region
        $region29: #{tpu_custom_call.1} parent=27 // pred_check
          %p151 = pneg %p41
        $region30: #{tpu_custom_call.1} parent=27 // pred_check_branch
          %153 = sbr.rel (%p151) target = $region32
        $region31: #{tpu_custom_call.1} parent=27 // pred_region
          %154 = dma.done %s147, 256
        $region32: #{tpu_custom_call.1} parent=27 // pred_fallthru
          _
        // Predicated region
        $region33: #{tpu_custom_call.1} parent=27 // pred_check
          %p155 = pneg %p62
        $region34: #{tpu_custom_call.1} parent=27 // pred_check_branch
          %157 = sbr.rel (%p155) target = $region36
        $region35: #{tpu_custom_call.1} parent=27 // pred_region
          %158 = dma.done [#allocation6], 16384
        $region36: #{tpu_custom_call.1} parent=27 // pred_fallthru
          _
        %s159 = sand.u32 %s28, 1
        %s160 = scalar_lea.sflag [#allocation3], %s159
        %s161 = sand.u32 %s28, 1
        %s162 = smul.addr %s161, 16
        %s163 = scalar_lea.vmem [#allocation2], %s162
        %p164 = pneg %p41
        %p165 = pneg %p38
        %p166 = pneg %p62
        %p167 = pneg %p59
        %p168 = pneg %p88
        %p169 = pneg %p85
        %s170 = sand.u32 %s75, 1
        %s171 = scalar_lea.sflag [#allocation4], %s170
        %s172 = sand.u32 %s75, 1
        %s173 = smul.addr %s172, 64
        %s174 = scalar_lea.vmem [#allocation7], %s173
        %v175 = vld [vmem:[%s150] sm:$0xff]
        %v176 = vld [vmem:[%s150 + $0x8] sm:$0xff]
        %v177 = vmul.f32 %v175, 0.5
        %v178 = vmul.f32 %v176, 0.5
        %v179 = vpack.c.bf16 %v175, %v175
        %v180 = vpack.c.bf16 %v176, %v176
        %v181 = vld [vmem:[#allocation5] sm:$0xff]
        %v182 = vld [vmem:[#allocation5 + $0x20] sm:$0xff]
        %v183 = vld [vmem:[#allocation5 + $0x40] sm:$0xff]
        %v184 = vld [vmem:[#allocation5 + $0x60] sm:$0xff]
        %v185 = vld [vmem:[#allocation5 + $0x80] sm:$0xff]
        %v186 = vld [vmem:[#allocation5 + $0xa0] sm:$0xff]
        %v187 = vld [vmem:[#allocation5 + $0xc0] sm:$0xff]
        %v188 = vld [vmem:[#allocation5 + $0xe0] sm:$0xff]
        %v189 = vld [vmem:[#allocation5 + $0x100] sm:$0xff]
        %v190 = vld [vmem:[#allocation5 + $0x120] sm:$0xff]
        %v191 = vld [vmem:[#allocation5 + $0x140] sm:$0xff]
        %v192 = vld [vmem:[#allocation5 + $0x160] sm:$0xff]
        %v193 = vld [vmem:[#allocation5 + $0x180] sm:$0xff]
        %v194 = vld [vmem:[#allocation5 + $0x1a0] sm:$0xff]
        %v195 = vld [vmem:[#allocation5 + $0x1c0] sm:$0xff]
        %v196 = vld [vmem:[#allocation5 + $0x1e0] sm:$0xff]
        %v197 = vld [vmem:[#allocation5 + $0x200] sm:$0xff]
        %v198 = vld [vmem:[#allocation5 + $0x220] sm:$0xff]
        %v199 = vld [vmem:[#allocation5 + $0x240] sm:$0xff]
        %v200 = vld [vmem:[#allocation5 + $0x260] sm:$0xff]
        %v201 = vld [vmem:[#allocation5 + $0x280] sm:$0xff]
        %v202 = vld [vmem:[#allocation5 + $0x2a0] sm:$0xff]
        %v203 = vld [vmem:[#allocation5 + $0x2c0] sm:$0xff]
        %v204 = vld [vmem:[#allocation5 + $0x2e0] sm:$0xff]
        %v205 = vld [vmem:[#allocation5 + $0x300] sm:$0xff]
        %v206 = vld [vmem:[#allocation5 + $0x320] sm:$0xff]
        %v207 = vld [vmem:[#allocation5 + $0x340] sm:$0xff]
        %v208 = vld [vmem:[#allocation5 + $0x360] sm:$0xff]
        %v209 = vld [vmem:[#allocation5 + $0x380] sm:$0xff]
        %v210 = vld [vmem:[#allocation5 + $0x3a0] sm:$0xff]
        %v211 = vld [vmem:[#allocation5 + $0x3c0] sm:$0xff]
        %v212 = vld [vmem:[#allocation5 + $0x3e0] sm:$0xff]
        %v245 = vunpack.c.l.b16 %v181
        %v246 = vunpack.c.h.b16 %v181
        %v247 = vunpack.c.l.b16 %v182
        %v248 = vunpack.c.h.b16 %v182
        %v249 = vunpack.c.l.b16 %v183
        %v250 = vunpack.c.h.b16 %v183
        %v251 = vunpack.c.l.b16 %v184
        %v252 = vunpack.c.h.b16 %v184
        %v253 = vunpack.c.l.b16 %v185
        %v254 = vunpack.c.h.b16 %v185
        %v255 = vunpack.c.l.b16 %v186
        %v256 = vunpack.c.h.b16 %v186
        %v257 = vunpack.c.l.b16 %v187
        %v258 = vunpack.c.h.b16 %v187
        %v259 = vunpack.c.l.b16 %v188
        %v260 = vunpack.c.h.b16 %v188
        %v261 = vunpack.c.l.b16 %v189
        %v262 = vunpack.c.h.b16 %v189
        %v263 = vunpack.c.l.b16 %v190
        %v264 = vunpack.c.h.b16 %v190
        %v265 = vunpack.c.l.b16 %v191
        %v266 = vunpack.c.h.b16 %v191
        %v267 = vunpack.c.l.b16 %v192
        %v268 = vunpack.c.h.b16 %v192
        %v269 = vunpack.c.l.b16 %v193
        %v270 = vunpack.c.h.b16 %v193
        %v271 = vunpack.c.l.b16 %v194
        %v272 = vunpack.c.h.b16 %v194
        %v273 = vunpack.c.l.b16 %v195
        %v274 = vunpack.c.h.b16 %v195
        %v275 = vunpack.c.l.b16 %v196
        %v276 = vunpack.c.h.b16 %v196
        %v277 = vunpack.c.l.b16 %v197
        %v278 = vunpack.c.h.b16 %v197
        %v279 = vunpack.c.l.b16 %v198
        %v280 = vunpack.c.h.b16 %v198
        %v281 = vunpack.c.l.b16 %v199
        %v282 = vunpack.c.h.b16 %v199
        %v283 = vunpack.c.l.b16 %v200
        %v284 = vunpack.c.h.b16 %v200
        %v285 = vunpack.c.l.b16 %v201
        %v286 = vunpack.c.h.b16 %v201
        %v287 = vunpack.c.l.b16 %v202
        %v288 = vunpack.c.h.b16 %v202
        %v289 = vunpack.c.l.b16 %v203
        %v290 = vunpack.c.h.b16 %v203
        %v291 = vunpack.c.l.b16 %v204
        %v292 = vunpack.c.h.b16 %v204
        %v293 = vunpack.c.l.b16 %v205
        %v294 = vunpack.c.h.b16 %v205
        %v295 = vunpack.c.l.b16 %v206
        %v296 = vunpack.c.h.b16 %v206
        %v297 = vunpack.c.l.b16 %v207
        %v298 = vunpack.c.h.b16 %v207
        %v299 = vunpack.c.l.b16 %v208
        %v300 = vunpack.c.h.b16 %v208
        %v301 = vunpack.c.l.b16 %v209
        %v302 = vunpack.c.h.b16 %v209
        %v303 = vunpack.c.l.b16 %v210
        %v304 = vunpack.c.h.b16 %v210
        %v305 = vunpack.c.l.b16 %v211
        %v306 = vunpack.c.h.b16 %v211
        %v307 = vunpack.c.l.b16 %v212
        %v308 = vunpack.c.h.b16 %v212
        %v309 = vpack.c.b16 %v247, %v245
        %v310 = vpack.c.b16 %v248, %v246
        %v311 = vpack.c.b16 %v251, %v249
        %v312 = vpack.c.b16 %v252, %v250
        %v313 = vpack.c.b16 %v255, %v253
        %v314 = vpack.c.b16 %v256, %v254
        %v315 = vpack.c.b16 %v259, %v257
        %v316 = vpack.c.b16 %v260, %v258
        %v317 = vpack.c.b16 %v263, %v261
        %v318 = vpack.c.b16 %v264, %v262
        %v319 = vpack.c.b16 %v267, %v265
        %v320 = vpack.c.b16 %v268, %v266
        %v321 = vpack.c.b16 %v271, %v269
        %v322 = vpack.c.b16 %v272, %v270
        %v323 = vpack.c.b16 %v275, %v273
        %v324 = vpack.c.b16 %v276, %v274
        %v325 = vpack.c.b16 %v279, %v277
        %v326 = vpack.c.b16 %v280, %v278
        %v327 = vpack.c.b16 %v283, %v281
        %v328 = vpack.c.b16 %v284, %v282
        %v329 = vpack.c.b16 %v287, %v285
        %v330 = vpack.c.b16 %v288, %v286
        %v331 = vpack.c.b16 %v291, %v289
        %v332 = vpack.c.b16 %v292, %v290
        %v333 = vpack.c.b16 %v295, %v293
        %v334 = vpack.c.b16 %v296, %v294
        %v335 = vpack.c.b16 %v299, %v297
        %v336 = vpack.c.b16 %v300, %v298
        %v337 = vpack.c.b16 %v303, %v301
        %v338 = vpack.c.b16 %v304, %v302
        %v339 = vpack.c.b16 %v307, %v305
        %v340 = vpack.c.b16 %v308, %v306
        %373 = vmatprep.subr.bf16.mxu0 %v310
        %374 = vmatpush1.bf16.msra.mxu0 %v309
        %375 = vmatprep.subr.bf16.mxu0 %v312
        %376 = vmatpush1.bf16.msra.mxu0 %v311
        %377 = vmatprep.subr.bf16.mxu0 %v314
        %378 = vmatpush1.bf16.msra.mxu0 %v313
        %379 = vmatprep.subr.bf16.mxu0 %v316
        %380 = vmatpush1.bf16.msra.mxu0 %v315
        %381 = vmatprep.subr.bf16.mxu0 %v318
        %382 = vmatpush1.bf16.msra.mxu0 %v317
        %383 = vmatprep.subr.bf16.mxu0 %v320
        %384 = vmatpush1.bf16.msra.mxu0 %v319
        %385 = vmatprep.subr.bf16.mxu0 %v322
        %386 = vmatpush1.bf16.msra.mxu0 %v321
        %387 = vmatprep.subr.bf16.mxu0 %v324
        %388 = vmatpush1.bf16.msra.mxu0 %v323
        %389 = vmatprep.subr.bf16.mxu0 %v326
        %390 = vmatpush1.bf16.msra.mxu0 %v325
        %391 = vmatprep.subr.bf16.mxu0 %v328
        %392 = vmatpush1.bf16.msra.mxu0 %v327
        %393 = vmatprep.subr.bf16.mxu0 %v330
        %394 = vmatpush1.bf16.msra.mxu0 %v329
        %395 = vmatprep.subr.bf16.mxu0 %v332
        %396 = vmatpush1.bf16.msra.mxu0 %v331
        %397 = vmatprep.subr.bf16.mxu0 %v334
        %398 = vmatpush1.bf16.msra.mxu0 %v333
        %399 = vmatprep.subr.bf16.mxu0 %v336
        %400 = vmatpush1.bf16.msra.mxu0 %v335
        %401 = vmatprep.subr.bf16.mxu0 %v338
        %402 = vmatpush1.bf16.msra.mxu0 %v337
        %403 = vmatprep.subr.bf16.mxu0 %v340
        %404 = vmatpush1.bf16.msra.mxu0 %v339
        %405 = vmatprep.mubr.bf16.mxu0 %v180
        %406 = vmatmul.mubr.bf16.gmra.mrb[0].mxu0 %v179
        %v407 = vpop.f32.mrb[0].mxu0
        %v408 = vadd.f32 0.0, %v407
        %v409 = vpop.f32.mrb[0].mxu0
        %v410 = vadd.f32 0.0, %v409
        %v411 = vpop.f32.mrb[0].mxu0
        %v412 = vpop.f32.mrb[0].mxu0
        %413 = vdwg.mxu0
        %v414 = vtanh.pop %v408
        %v415 = vtanh.pop %v410
        %v416 = vmul.f32 %v177, %v414
        %v417 = vmul.f32 %v178, %v415
        %v418 = vadd.f32 %v416, %v177
        %v419 = vadd.f32 %v417, %v178
        %420 = vst [vmem:[%s174] sm:$0xff] %v418
        %421 = vst [vmem:[%s174 + $0x8] sm:$0xff] %v419
        %v422 = vld [vmem:[#allocation5 + $0x8] sm:$0xff]
        %v423 = vld [vmem:[#allocation5 + $0x28] sm:$0xff]
        %v424 = vld [vmem:[#allocation5 + $0x48] sm:$0xff]
        %v425 = vld [vmem:[#allocation5 + $0x68] sm:$0xff]
        %v426 = vld [vmem:[#allocation5 + $0x88] sm:$0xff]
        %v427 = vld [vmem:[#allocation5 + $0xa8] sm:$0xff]
        %v428 = vld [vmem:[#allocation5 + $0xc8] sm:$0xff]
        %v429 = vld [vmem:[#allocation5 + $0xe8] sm:$0xff]
        %v430 = vld [vmem:[#allocation5 + $0x108] sm:$0xff]
        %v431 = vld [vmem:[#allocation5 + $0x128] sm:$0xff]
        %v432 = vld [vmem:[#allocation5 + $0x148] sm:$0xff]
        %v433 = vld [vmem:[#allocation5 + $0x168] sm:$0xff]
        %v434 = vld [vmem:[#allocation5 + $0x188] sm:$0xff]
        %v435 = vld [vmem:[#allocation5 + $0x1a8] sm:$0xff]
        %v436 = vld [vmem:[#allocation5 + $0x1c8] sm:$0xff]
        %v437 = vld [vmem:[#allocation5 + $0x1e8] sm:$0xff]
        %v438 = vld [vmem:[#allocation5 + $0x208] sm:$0xff]
        %v439 = vld [vmem:[#allocation5 + $0x228] sm:$0xff]
        %v440 = vld [vmem:[#allocation5 + $0x248] sm:$0xff]
        %v441 = vld [vmem:[#allocation5 + $0x268] sm:$0xff]
        %v442 = vld [vmem:[#allocation5 + $0x288] sm:$0xff]
        %v443 = vld [vmem:[#allocation5 + $0x2a8] sm:$0xff]
        %v444 = vld [vmem:[#allocation5 + $0x2c8] sm:$0xff]
        %v445 = vld [vmem:[#allocation5 + $0x2e8] sm:$0xff]
        %v446 = vld [vmem:[#allocation5 + $0x308] sm:$0xff]
        %v447 = vld [vmem:[#allocation5 + $0x328] sm:$0xff]
        %v448 = vld [vmem:[#allocation5 + $0x348] sm:$0xff]
        %v449 = vld [vmem:[#allocation5 + $0x368] sm:$0xff]
        %v450 = vld [vmem:[#allocation5 + $0x388] sm:$0xff]
        %v451 = vld [vmem:[#allocation5 + $0x3a8] sm:$0xff]
        %v452 = vld [vmem:[#allocation5 + $0x3c8] sm:$0xff]
        %v453 = vld [vmem:[#allocation5 + $0x3e8] sm:$0xff]
        %v486 = vunpack.c.l.b16 %v422
        %v487 = vunpack.c.h.b16 %v422
        %v488 = vunpack.c.l.b16 %v423
        %v489 = vunpack.c.h.b16 %v423
        %v490 = vunpack.c.l.b16 %v424
        %v491 = vunpack.c.h.b16 %v424
        %v492 = vunpack.c.l.b16 %v425
        %v493 = vunpack.c.h.b16 %v425
        %v494 = vunpack.c.l.b16 %v426
        %v495 = vunpack.c.h.b16 %v426
        %v496 = vunpack.c.l.b16 %v427
        %v497 = vunpack.c.h.b16 %v427
        %v498 = vunpack.c.l.b16 %v428
        %v499 = vunpack.c.h.b16 %v428
        %v500 = vunpack.c.l.b16 %v429
        %v501 = vunpack.c.h.b16 %v429
        %v502 = vunpack.c.l.b16 %v430
        %v503 = vunpack.c.h.b16 %v430
        %v504 = vunpack.c.l.b16 %v431
        %v505 = vunpack.c.h.b16 %v431
        %v506 = vunpack.c.l.b16 %v432
        %v507 = vunpack.c.h.b16 %v432
        %v508 = vunpack.c.l.b16 %v433
        %v509 = vunpack.c.h.b16 %v433
        %v510 = vunpack.c.l.b16 %v434
        %v511 = vunpack.c.h.b16 %v434
        %v512 = vunpack.c.l.b16 %v435
        %v513 = vunpack.c.h.b16 %v435
        %v514 = vunpack.c.l.b16 %v436
        %v515 = vunpack.c.h.b16 %v436
        %v516 = vunpack.c.l.b16 %v437
        %v517 = vunpack.c.h.b16 %v437
        %v518 = vunpack.c.l.b16 %v438
        %v519 = vunpack.c.h.b16 %v438
        %v520 = vunpack.c.l.b16 %v439
        %v521 = vunpack.c.h.b16 %v439
        %v522 = vunpack.c.l.b16 %v440
        %v523 = vunpack.c.h.b16 %v440
        %v524 = vunpack.c.l.b16 %v441
        %v525 = vunpack.c.h.b16 %v441
        %v526 = vunpack.c.l.b16 %v442
        %v527 = vunpack.c.h.b16 %v442
        %v528 = vunpack.c.l.b16 %v443
        %v529 = vunpack.c.h.b16 %v443
        %v530 = vunpack.c.l.b16 %v444
        %v531 = vunpack.c.h.b16 %v444
        %v532 = vunpack.c.l.b16 %v445
        %v533 = vunpack.c.h.b16 %v445
        %v534 = vunpack.c.l.b16 %v446
        %v535 = vunpack.c.h.b16 %v446
        %v536 = vunpack.c.l.b16 %v447
        %v537 = vunpack.c.h.b16 %v447
        %v538 = vunpack.c.l.b16 %v448
        %v539 = vunpack.c.h.b16 %v448
        %v540 = vunpack.c.l.b16 %v449
        %v541 = vunpack.c.h.b16 %v449
        %v542 = vunpack.c.l.b16 %v450
        %v543 = vunpack.c.h.b16 %v450
        %v544 = vunpack.c.l.b16 %v451
        %v545 = vunpack.c.h.b16 %v451
        %v546 = vunpack.c.l.b16 %v452
        %v547 = vunpack.c.h.b16 %v452
        %v548 = vunpack.c.l.b16 %v453
        %v549 = vunpack.c.h.b16 %v453
        %v550 = vpack.c.b16 %v488, %v486
        %v551 = vpack.c.b16 %v489, %v487
        %v552 = vpack.c.b16 %v492, %v490
        %v553 = vpack.c.b16 %v493, %v491
        %v554 = vpack.c.b16 %v496, %v494
        %v555 = vpack.c.b16 %v497, %v495
        %v556 = vpack.c.b16 %v500, %v498
        %v557 = vpack.c.b16 %v501, %v499
        %v558 = vpack.c.b16 %v504, %v502
        %v559 = vpack.c.b16 %v505, %v503
        %v560 = vpack.c.b16 %v508, %v506
        %v561 = vpack.c.b16 %v509, %v507
        %v562 = vpack.c.b16 %v512, %v510
        %v563 = vpack.c.b16 %v513, %v511
        %v564 = vpack.c.b16 %v516, %v514
        %v565 = vpack.c.b16 %v517, %v515
        %v566 = vpack.c.b16 %v520, %v518
        %v567 = vpack.c.b16 %v521, %v519
        %v568 = vpack.c.b16 %v524, %v522
        %v569 = vpack.c.b16 %v525, %v523
        %v570 = vpack.c.b16 %v528, %v526
        %v571 = vpack.c.b16 %v529, %v527
        %v572 = vpack.c.b16 %v532, %v530
        %v573 = vpack.c.b16 %v533, %v531
        %v574 = vpack.c.b16 %v536, %v534
        %v575 = vpack.c.b16 %v537, %v535
        %v576 = vpack.c.b16 %v540, %v538
        %v577 = vpack.c.b16 %v541, %v539
        %v578 = vpack.c.b16 %v544, %v542
        %v579 = vpack.c.b16 %v545, %v543
        %v580 = vpack.c.b16 %v548, %v546
        %v581 = vpack.c.b16 %v549, %v547
        %614 = vmatprep.subr.bf16.mxu0 %v551
        %615 = vmatpush1.bf16.msra.mxu0 %v550
        %616 = vmatprep.subr.bf16.mxu0 %v553
        %617 = vmatpush1.bf16.msra.mxu0 %v552
        %618 = vmatprep.subr.bf16.mxu0 %v555
        %619 = vmatpush1.bf16.msra.mxu0 %v554
        %620 = vmatprep.subr.bf16.mxu0 %v557
        %621 = vmatpush1.bf16.msra.mxu0 %v556
        %622 = vmatprep.subr.bf16.mxu0 %v559
        %623 = vmatpush1.bf16.msra.mxu0 %v558
        %624 = vmatprep.subr.bf16.mxu0 %v561
        %625 = vmatpush1.bf16.msra.mxu0 %v560
        %626 = vmatprep.subr.bf16.mxu0 %v563
        %627 = vmatpush1.bf16.msra.mxu0 %v562
        %628 = vmatprep.subr.bf16.mxu0 %v565
        %629 = vmatpush1.bf16.msra.mxu0 %v564
        %630 = vmatprep.subr.bf16.mxu0 %v567
        %631 = vmatpush1.bf16.msra.mxu0 %v566
        %632 = vmatprep.subr.bf16.mxu0 %v569
        %633 = vmatpush1.bf16.msra.mxu0 %v568
        %634 = vmatprep.subr.bf16.mxu0 %v571
        %635 = vmatpush1.bf16.msra.mxu0 %v570
        %636 = vmatprep.subr.bf16.mxu0 %v573
        %637 = vmatpush1.bf16.msra.mxu0 %v572
        %638 = vmatprep.subr.bf16.mxu0 %v575
        %639 = vmatpush1.bf16.msra.mxu0 %v574
        %640 = vmatprep.subr.bf16.mxu0 %v577
        %641 = vmatpush1.bf16.msra.mxu0 %v576
        %642 = vmatprep.subr.bf16.mxu0 %v579
        %643 = vmatpush1.bf16.msra.mxu0 %v578
        %644 = vmatprep.subr.bf16.mxu0 %v581
        %645 = vmatpush1.bf16.msra.mxu0 %v580
        %646 = vmatprep.mubr.bf16.mxu0 %v180
        %647 = vmatmul.mubr.bf16.gmra.mrb[0].mxu0 %v179
        %v648 = vpop.f32.mrb[0].mxu0
        %v649 = vadd.f32 0.0, %v648
        %v650 = vpop.f32.mrb[0].mxu0
        %v651 = vadd.f32 0.0, %v650
        %v652 = vpop.f32.mrb[0].mxu0
        %v653 = vpop.f32.mrb[0].mxu0
        %654 = vdwg.mxu0
        %v655 = vtanh.pop %v649
        %v656 = vtanh.pop %v651
        %v657 = vmul.f32 %v177, %v655
        %v658 = vmul.f32 %v178, %v656
        %v659 = vadd.f32 %v657, %v177
        %v660 = vadd.f32 %v658, %v178
        %s661 = scalar_lea.vmem %s174, 16 [#allocation7]
        %662 = vst [vmem:[%s661] sm:$0xff] %v659
        %663 = vst [vmem:[%s661 + $0x8] sm:$0xff] %v660
        %v664 = vld [vmem:[#allocation5 + $0x10] sm:$0xff]
        %v665 = vld [vmem:[#allocation5 + $0x30] sm:$0xff]
        %v666 = vld [vmem:[#allocation5 + $0x50] sm:$0xff]
        %v667 = vld [vmem:[#allocation5 + $0x70] sm:$0xff]
        %v668 = vld [vmem:[#allocation5 + $0x90] sm:$0xff]
        %v669 = vld [vmem:[#allocation5 + $0xb0] sm:$0xff]
        %v670 = vld [vmem:[#allocation5 + $0xd0] sm:$0xff]
        %v671 = vld [vmem:[#allocation5 + $0xf0] sm:$0xff]
        %v672 = vld [vmem:[#allocation5 + $0x110] sm:$0xff]
        %v673 = vld [vmem:[#allocation5 + $0x130] sm:$0xff]
        %v674 = vld [vmem:[#allocation5 + $0x150] sm:$0xff]
        %v675 = vld [vmem:[#allocation5 + $0x170] sm:$0xff]
        %v676 = vld [vmem:[#allocation5 + $0x190] sm:$0xff]
        %v677 = vld [vmem:[#allocation5 + $0x1b0] sm:$0xff]
        %v678 = vld [vmem:[#allocation5 + $0x1d0] sm:$0xff]
        %v679 = vld [vmem:[#allocation5 + $0x1f0] sm:$0xff]
        %v680 = vld [vmem:[#allocation5 + $0x210] sm:$0xff]
        %v681 = vld [vmem:[#allocation5 + $0x230] sm:$0xff]
        %v682 = vld [vmem:[#allocation5 + $0x250] sm:$0xff]
        %v683 = vld [vmem:[#allocation5 + $0x270] sm:$0xff]
        %v684 = vld [vmem:[#allocation5 + $0x290] sm:$0xff]
        %v685 = vld [vmem:[#allocation5 + $0x2b0] sm:$0xff]
        %v686 = vld [vmem:[#allocation5 + $0x2d0] sm:$0xff]
        %v687 = vld [vmem:[#allocation5 + $0x2f0] sm:$0xff]
        %v688 = vld [vmem:[#allocation5 + $0x310] sm:$0xff]
        %v689 = vld [vmem:[#allocation5 + $0x330] sm:$0xff]
        %v690 = vld [vmem:[#allocation5 + $0x350] sm:$0xff]
        %v691 = vld [vmem:[#allocation5 + $0x370] sm:$0xff]
        %v692 = vld [vmem:[#allocation5 + $0x390] sm:$0xff]
        %v693 = vld [vmem:[#allocation5 + $0x3b0] sm:$0xff]
        %v694 = vld [vmem:[#allocation5 + $0x3d0] sm:$0xff]
        %v695 = vld [vmem:[#allocation5 + $0x3f0] sm:$0xff]
        %v728 = vunpack.c.l.b16 %v664
        %v729 = vunpack.c.h.b16 %v664
        %v730 = vunpack.c.l.b16 %v665
        %v731 = vunpack.c.h.b16 %v665
        %v732 = vunpack.c.l.b16 %v666
        %v733 = vunpack.c.h.b16 %v666
        %v734 = vunpack.c.l.b16 %v667
        %v735 = vunpack.c.h.b16 %v667
        %v736 = vunpack.c.l.b16 %v668
        %v737 = vunpack.c.h.b16 %v668
        %v738 = vunpack.c.l.b16 %v669
        %v739 = vunpack.c.h.b16 %v669
        %v740 = vunpack.c.l.b16 %v670
        %v741 = vunpack.c.h.b16 %v670
        %v742 = vunpack.c.l.b16 %v671
        %v743 = vunpack.c.h.b16 %v671
        %v744 = vunpack.c.l.b16 %v672
        %v745 = vunpack.c.h.b16 %v672
        %v746 = vunpack.c.l.b16 %v673
        %v747 = vunpack.c.h.b16 %v673
        %v748 = vunpack.c.l.b16 %v674
        %v749 = vunpack.c.h.b16 %v674
        %v750 = vunpack.c.l.b16 %v675
        %v751 = vunpack.c.h.b16 %v675
        %v752 = vunpack.c.l.b16 %v676
        %v753 = vunpack.c.h.b16 %v676
        %v754 = vunpack.c.l.b16 %v677
        %v755 = vunpack.c.h.b16 %v677
        %v756 = vunpack.c.l.b16 %v678
        %v757 = vunpack.c.h.b16 %v678
        %v758 = vunpack.c.l.b16 %v679
        %v759 = vunpack.c.h.b16 %v679
        %v760 = vunpack.c.l.b16 %v680
        %v761 = vunpack.c.h.b16 %v680
        %v762 = vunpack.c.l.b16 %v681
        %v763 = vunpack.c.h.b16 %v681
        %v764 = vunpack.c.l.b16 %v682
        %v765 = vunpack.c.h.b16 %v682
        %v766 = vunpack.c.l.b16 %v683
        %v767 = vunpack.c.h.b16 %v683
        %v768 = vunpack.c.l.b16 %v684
        %v769 = vunpack.c.h.b16 %v684
        %v770 = vunpack.c.l.b16 %v685
        %v771 = vunpack.c.h.b16 %v685
        %v772 = vunpack.c.l.b16 %v686
        %v773 = vunpack.c.h.b16 %v686
        %v774 = vunpack.c.l.b16 %v687
        %v775 = vunpack.c.h.b16 %v687
        %v776 = vunpack.c.l.b16 %v688
        %v777 = vunpack.c.h.b16 %v688
        %v778 = vunpack.c.l.b16 %v689
        %v779 = vunpack.c.h.b16 %v689
        %v780 = vunpack.c.l.b16 %v690
        %v781 = vunpack.c.h.b16 %v690
        %v782 = vunpack.c.l.b16 %v691
        %v783 = vunpack.c.h.b16 %v691
        %v784 = vunpack.c.l.b16 %v692
        %v785 = vunpack.c.h.b16 %v692
        %v786 = vunpack.c.l.b16 %v693
        %v787 = vunpack.c.h.b16 %v693
        %v788 = vunpack.c.l.b16 %v694
        %v789 = vunpack.c.h.b16 %v694
        %v790 = vunpack.c.l.b16 %v695
        %v791 = vunpack.c.h.b16 %v695
        %v792 = vpack.c.b16 %v730, %v728
        %v793 = vpack.c.b16 %v731, %v729
        %v794 = vpack.c.b16 %v734, %v732
        %v795 = vpack.c.b16 %v735, %v733
        %v796 = vpack.c.b16 %v738, %v736
        %v797 = vpack.c.b16 %v739, %v737
        %v798 = vpack.c.b16 %v742, %v740
        %v799 = vpack.c.b16 %v743, %v741
        %v800 = vpack.c.b16 %v746, %v744
        %v801 = vpack.c.b16 %v747, %v745
        %v802 = vpack.c.b16 %v750, %v748
        %v803 = vpack.c.b16 %v751, %v749
        %v804 = vpack.c.b16 %v754, %v752
        %v805 = vpack.c.b16 %v755, %v753
        %v806 = vpack.c.b16 %v758, %v756
        %v807 = vpack.c.b16 %v759, %v757
        %v808 = vpack.c.b16 %v762, %v760
        %v809 = vpack.c.b16 %v763, %v761
        %v810 = vpack.c.b16 %v766, %v764
        %v811 = vpack.c.b16 %v767, %v765
        %v812 = vpack.c.b16 %v770, %v768
        %v813 = vpack.c.b16 %v771, %v769
        %v814 = vpack.c.b16 %v774, %v772
        %v815 = vpack.c.b16 %v775, %v773
        %v816 = vpack.c.b16 %v778, %v776
        %v817 = vpack.c.b16 %v779, %v777
        %v818 = vpack.c.b16 %v782, %v780
        %v819 = vpack.c.b16 %v783, %v781
        %v820 = vpack.c.b16 %v786, %v784
        %v821 = vpack.c.b16 %v787, %v785
        %v822 = vpack.c.b16 %v790, %v788
        %v823 = vpack.c.b16 %v791, %v789
        %856 = vmatprep.subr.bf16.mxu0 %v793
        %857 = vmatpush1.bf16.msra.mxu0 %v792
        %858 = vmatprep.subr.bf16.mxu0 %v795
        %859 = vmatpush1.bf16.msra.mxu0 %v794
        %860 = vmatprep.subr.bf16.mxu0 %v797
        %861 = vmatpush1.bf16.msra.mxu0 %v796
        %862 = vmatprep.subr.bf16.mxu0 %v799
        %863 = vmatpush1.bf16.msra.mxu0 %v798
        %864 = vmatprep.subr.bf16.mxu0 %v801
        %865 = vmatpush1.bf16.msra.mxu0 %v800
        %866 = vmatprep.subr.bf16.mxu0 %v803
        %867 = vmatpush1.bf16.msra.mxu0 %v802
        %868 = vmatprep.subr.bf16.mxu0 %v805
        %869 = vmatpush1.bf16.msra.mxu0 %v804
        %870 = vmatprep.subr.bf16.mxu0 %v807
        %871 = vmatpush1.bf16.msra.mxu0 %v806
        %872 = vmatprep.subr.bf16.mxu0 %v809
        %873 = vmatpush1.bf16.msra.mxu0 %v808
        %874 = vmatprep.subr.bf16.mxu0 %v811
        %875 = vmatpush1.bf16.msra.mxu0 %v810
        %876 = vmatprep.subr.bf16.mxu0 %v813
        %877 = vmatpush1.bf16.msra.mxu0 %v812
        %878 = vmatprep.subr.bf16.mxu0 %v815
        %879 = vmatpush1.bf16.msra.mxu0 %v814
        %880 = vmatprep.subr.bf16.mxu0 %v817
        %881 = vmatpush1.bf16.msra.mxu0 %v816
        %882 = vmatprep.subr.bf16.mxu0 %v819
        %883 = vmatpush1.bf16.msra.mxu0 %v818
        %884 = vmatprep.subr.bf16.mxu0 %v821
        %885 = vmatpush1.bf16.msra.mxu0 %v820
        %886 = vmatprep.subr.bf16.mxu0 %v823
        %887 = vmatpush1.bf16.msra.mxu0 %v822
        %888 = vmatprep.mubr.bf16.mxu0 %v180
        %889 = vmatmul.mubr.bf16.gmra.mrb[0].mxu0 %v179
        %v890 = vpop.f32.mrb[0].mxu0
        %v891 = vadd.f32 0.0, %v890
        %v892 = vpop.f32.mrb[0].mxu0
        %v893 = vadd.f32 0.0, %v892
        %v894 = vpop.f32.mrb[0].mxu0
        %v895 = vpop.f32.mrb[0].mxu0
        %896 = vdwg.mxu0
        %v897 = vtanh.pop %v891
        %v898 = vtanh.pop %v893
        %v899 = vmul.f32 %v177, %v897
        %v900 = vmul.f32 %v178, %v898
        %v901 = vadd.f32 %v899, %v177
        %v902 = vadd.f32 %v900, %v178
        %s903 = scalar_lea.vmem %s174, 32 [#allocation7]
        %904 = vst [vmem:[%s903] sm:$0xff] %v901
        %905 = vst [vmem:[%s903 + $0x8] sm:$0xff] %v902
        %v906 = vld [vmem:[#allocation5 + $0x18] sm:$0xff]
        %v907 = vld [vmem:[#allocation5 + $0x38] sm:$0xff]
        %v908 = vld [vmem:[#allocation5 + $0x58] sm:$0xff]
        %v909 = vld [vmem:[#allocation5 + $0x78] sm:$0xff]
        %v910 = vld [vmem:[#allocation5 + $0x98] sm:$0xff]
        %v911 = vld [vmem:[#allocation5 + $0xb8] sm:$0xff]
        %v912 = vld [vmem:[#allocation5 + $0xd8] sm:$0xff]
        %v913 = vld [vmem:[#allocation5 + $0xf8] sm:$0xff]
        %v914 = vld [vmem:[#allocation5 + $0x118] sm:$0xff]
        %v915 = vld [vmem:[#allocation5 + $0x138] sm:$0xff]
        %v916 = vld [vmem:[#allocation5 + $0x158] sm:$0xff]
        %v917 = vld [vmem:[#allocation5 + $0x178] sm:$0xff]
        %v918 = vld [vmem:[#allocation5 + $0x198] sm:$0xff]
        %v919 = vld [vmem:[#allocation5 + $0x1b8] sm:$0xff]
        %v920 = vld [vmem:[#allocation5 + $0x1d8] sm:$0xff]
        %v921 = vld [vmem:[#allocation5 + $0x1f8] sm:$0xff]
        %v922 = vld [vmem:[#allocation5 + $0x218] sm:$0xff]
        %v923 = vld [vmem:[#allocation5 + $0x238] sm:$0xff]
        %v924 = vld [vmem:[#allocation5 + $0x258] sm:$0xff]
        %v925 = vld [vmem:[#allocation5 + $0x278] sm:$0xff]
        %v926 = vld [vmem:[#allocation5 + $0x298] sm:$0xff]
        %v927 = vld [vmem:[#allocation5 + $0x2b8] sm:$0xff]
        %v928 = vld [vmem:[#allocation5 + $0x2d8] sm:$0xff]
        %v929 = vld [vmem:[#allocation5 + $0x2f8] sm:$0xff]
        %v930 = vld [vmem:[#allocation5 + $0x318] sm:$0xff]
        %v931 = vld [vmem:[#allocation5 + $0x338] sm:$0xff]
        %v932 = vld [vmem:[#allocation5 + $0x358] sm:$0xff]
        %v933 = vld [vmem:[#allocation5 + $0x378] sm:$0xff]
        %v934 = vld [vmem:[#allocation5 + $0x398] sm:$0xff]
        %v935 = vld [vmem:[#allocation5 + $0x3b8] sm:$0xff]
        %v936 = vld [vmem:[#allocation5 + $0x3d8] sm:$0xff]
        %v937 = vld [vmem:[#allocation5 + $0x3f8] sm:$0xff]
        %v970 = vunpack.c.l.b16 %v906
        %v971 = vunpack.c.h.b16 %v906
        %v972 = vunpack.c.l.b16 %v907
        %v973 = vunpack.c.h.b16 %v907
        %v974 = vunpack.c.l.b16 %v908
        %v975 = vunpack.c.h.b16 %v908
        %v976 = vunpack.c.l.b16 %v909
        %v977 = vunpack.c.h.b16 %v909
        %v978 = vunpack.c.l.b16 %v910
        %v979 = vunpack.c.h.b16 %v910
        %v980 = vunpack.c.l.b16 %v911
        %v981 = vunpack.c.h.b16 %v911
        %v982 = vunpack.c.l.b16 %v912
        %v983 = vunpack.c.h.b16 %v912
        %v984 = vunpack.c.l.b16 %v913
        %v985 = vunpack.c.h.b16 %v913
        %v986 = vunpack.c.l.b16 %v914
        %v987 = vunpack.c.h.b16 %v914
        %v988 = vunpack.c.l.b16 %v915
        %v989 = vunpack.c.h.b16 %v915
        %v990 = vunpack.c.l.b16 %v916
        %v991 = vunpack.c.h.b16 %v916
        %v992 = vunpack.c.l.b16 %v917
        %v993 = vunpack.c.h.b16 %v917
        %v994 = vunpack.c.l.b16 %v918
        %v995 = vunpack.c.h.b16 %v918
        %v996 = vunpack.c.l.b16 %v919
        %v997 = vunpack.c.h.b16 %v919
        %v998 = vunpack.c.l.b16 %v920
        %v999 = vunpack.c.h.b16 %v920
        %v1000 = vunpack.c.l.b16 %v921
        %v1001 = vunpack.c.h.b16 %v921
        %v1002 = vunpack.c.l.b16 %v922
        %v1003 = vunpack.c.h.b16 %v922
        %v1004 = vunpack.c.l.b16 %v923
        %v1005 = vunpack.c.h.b16 %v923
        %v1006 = vunpack.c.l.b16 %v924
        %v1007 = vunpack.c.h.b16 %v924
        %v1008 = vunpack.c.l.b16 %v925
        %v1009 = vunpack.c.h.b16 %v925
        %v1010 = vunpack.c.l.b16 %v926
        %v1011 = vunpack.c.h.b16 %v926
        %v1012 = vunpack.c.l.b16 %v927
        %v1013 = vunpack.c.h.b16 %v927
        %v1014 = vunpack.c.l.b16 %v928
        %v1015 = vunpack.c.h.b16 %v928
        %v1016 = vunpack.c.l.b16 %v929
        %v1017 = vunpack.c.h.b16 %v929
        %v1018 = vunpack.c.l.b16 %v930
        %v1019 = vunpack.c.h.b16 %v930
        %v1020 = vunpack.c.l.b16 %v931
        %v1021 = vunpack.c.h.b16 %v931
        %v1022 = vunpack.c.l.b16 %v932
        %v1023 = vunpack.c.h.b16 %v932
        %v1024 = vunpack.c.l.b16 %v933
        %v1025 = vunpack.c.h.b16 %v933
        %v1026 = vunpack.c.l.b16 %v934
        %v1027 = vunpack.c.h.b16 %v934
        %v1028 = vunpack.c.l.b16 %v935
        %v1029 = vunpack.c.h.b16 %v935
        %v1030 = vunpack.c.l.b16 %v936
        %v1031 = vunpack.c.h.b16 %v936
        %v1032 = vunpack.c.l.b16 %v937
        %v1033 = vunpack.c.h.b16 %v937
        %v1034 = vpack.c.b16 %v972, %v970
        %v1035 = vpack.c.b16 %v973, %v971
        %v1036 = vpack.c.b16 %v976, %v974
        %v1037 = vpack.c.b16 %v977, %v975
        %v1038 = vpack.c.b16 %v980, %v978
        %v1039 = vpack.c.b16 %v981, %v979
        %v1040 = vpack.c.b16 %v984, %v982
        %v1041 = vpack.c.b16 %v985, %v983
        %v1042 = vpack.c.b16 %v988, %v986
        %v1043 = vpack.c.b16 %v989, %v987
        %v1044 = vpack.c.b16 %v992, %v990
        %v1045 = vpack.c.b16 %v993, %v991
        %v1046 = vpack.c.b16 %v996, %v994
        %v1047 = vpack.c.b16 %v997, %v995
        %v1048 = vpack.c.b16 %v1000, %v998
        %v1049 = vpack.c.b16 %v1001, %v999
        %v1050 = vpack.c.b16 %v1004, %v1002
        %v1051 = vpack.c.b16 %v1005, %v1003
        %v1052 = vpack.c.b16 %v1008, %v1006
        %v1053 = vpack.c.b16 %v1009, %v1007
        %v1054 = vpack.c.b16 %v1012, %v1010
        %v1055 = vpack.c.b16 %v1013, %v1011
        %v1056 = vpack.c.b16 %v1016, %v1014
        %v1057 = vpack.c.b16 %v1017, %v1015
        %v1058 = vpack.c.b16 %v1020, %v1018
        %v1059 = vpack.c.b16 %v1021, %v1019
        %v1060 = vpack.c.b16 %v1024, %v1022
        %v1061 = vpack.c.b16 %v1025, %v1023
        %v1062 = vpack.c.b16 %v1028, %v1026
        %v1063 = vpack.c.b16 %v1029, %v1027
        %v1064 = vpack.c.b16 %v1032, %v1030
        %v1065 = vpack.c.b16 %v1033, %v1031
        %1098 = vmatprep.subr.bf16.mxu0 %v1035
        %1099 = vmatpush1.bf16.msra.mxu0 %v1034
        %1100 = vmatprep.subr.bf16.mxu0 %v1037
        %1101 = vmatpush1.bf16.msra.mxu0 %v1036
        %1102 = vmatprep.subr.bf16.mxu0 %v1039
        %1103 = vmatpush1.bf16.msra.mxu0 %v1038
        %1104 = vmatprep.subr.bf16.mxu0 %v1041
        %1105 = vmatpush1.bf16.msra.mxu0 %v1040
        %1106 = vmatprep.subr.bf16.mxu0 %v1043
        %1107 = vmatpush1.bf16.msra.mxu0 %v1042
        %1108 = vmatprep.subr.bf16.mxu0 %v1045
        %1109 = vmatpush1.bf16.msra.mxu0 %v1044
        %1110 = vmatprep.subr.bf16.mxu0 %v1047
        %1111 = vmatpush1.bf16.msra.mxu0 %v1046
        %1112 = vmatprep.subr.bf16.mxu0 %v1049
        %1113 = vmatpush1.bf16.msra.mxu0 %v1048
        %1114 = vmatprep.subr.bf16.mxu0 %v1051
        %1115 = vmatpush1.bf16.msra.mxu0 %v1050
        %1116 = vmatprep.subr.bf16.mxu0 %v1053
        %1117 = vmatpush1.bf16.msra.mxu0 %v1052
        %1118 = vmatprep.subr.bf16.mxu0 %v1055
        %1119 = vmatpush1.bf16.msra.mxu0 %v1054
        %1120 = vmatprep.subr.bf16.mxu0 %v1057
        %1121 = vmatpush1.bf16.msra.mxu0 %v1056
        %1122 = vmatprep.subr.bf16.mxu0 %v1059
        %1123 = vmatpush1.bf16.msra.mxu0 %v1058
        %1124 = vmatprep.subr.bf16.mxu0 %v1061
        %1125 = vmatpush1.bf16.msra.mxu0 %v1060
        %1126 = vmatprep.subr.bf16.mxu0 %v1063
        %1127 = vmatpush1.bf16.msra.mxu0 %v1062
        %1128 = vmatprep.subr.bf16.mxu0 %v1065
        %1129 = vmatpush1.bf16.msra.mxu0 %v1064
        %1130 = vmatprep.mubr.bf16.mxu0 %v180
        %1131 = vmatmul.mubr.bf16.gmra.mrb[0].mxu0 %v179
        %v1132 = vpop.f32.mrb[0].mxu0
        %v1133 = vadd.f32 0.0, %v1132
        %v1134 = vpop.f32.mrb[0].mxu0
        %v1135 = vadd.f32 0.0, %v1134
        %v1136 = vpop.f32.mrb[0].mxu0
        %v1137 = vpop.f32.mrb[0].mxu0
        %1138 = vdwg.mxu0
        %v1139 = vtanh.pop %v1133
        %v1140 = vtanh.pop %v1135
        %v1141 = vmul.f32 %v177, %v1139
        %v1142 = vmul.f32 %v178, %v1140
        %v1143 = vadd.f32 %v1141, %v177
        %v1144 = vadd.f32 %v1142, %v178
        %s1145 = scalar_lea.vmem %s174, 48 [#allocation7]
        %1146 = vst [vmem:[%s1145] sm:$0xff] %v1143
        %1147 = vst [vmem:[%s1145 + $0x8] sm:$0xff] %v1144
        %s1148 = sand.u32 %s75, 1
        %s1149 = scalar_lea.sflag [#allocation4], %s1148
        %s1150 = sand.u32 %s75, 1
        %s1151 = smul.addr %s1150, 64
        %s1152 = scalar_lea.vmem [#allocation7], %s1151
        // Predicated region
        $region37: #{tpu_custom_call.1} parent=27 // pred_check
          %p1153 = pneg %p85
        $region38: #{tpu_custom_call.1} parent=27 // pred_check_branch
          %1155 = sbr.rel (%p1153) target = $region40
        $region39: #{tpu_custom_call.1} parent=27 // pred_region
          %s1157 = ssub.s32 1024, 1024
          %1158 = vsyncadd %s1149, %s1157
          %s1159 = smul.addr %s20, 8
          %s1160 = smul.addr %s1159, 128
          %s1161 = scalar_lea.hbm %s2, %s1160
          %s1162 = sshll.u32 %s1152, 4
          %s1163 = int_to_ptr.vmem [resolvable:$true] %s1162
          %1168 = dma.vmem_to_hbm [thread:$0]  %s1163, 1024, %s1161, %s1149, 256, 256, 16
        $region40: #{tpu_custom_call.1} parent=27 // pred_fallthru
          _
      $region28: #{tpu_custom_call.1} parent=5 // pred_fallthru
        _
      %p1169 = scmp.le.s32.totalorder 2, %s15
      // Predicated region
      $region41: #{tpu_custom_call.1} parent=5 // pred_check
        %p1170 = pneg %p1169
      $region42: #{tpu_custom_call.1} parent=5 // pred_check_branch
        %1172 = sbr.rel (%p1170) target = $region44
      $region43: #{tpu_custom_call.1} parent=5 // pred_region
        %s1173 = ssub.s32 %s15, 2
        // Predicated region
        $region45: #{tpu_custom_call.1} parent=43 // pred_check
          %p1174 = pneg %p91
        $region46: #{tpu_custom_call.1} parent=43 // pred_check_branch
          %1176 = sbr.rel (%p1174) target = $region48
        $region47: #{tpu_custom_call.1} parent=43 // pred_region
          %s1177 = sand.u32 %s76, 1
          %s1178 = scalar_lea.sflag [#allocation4], %s1177
          %s1179 = sand.u32 %s76, 1
          %s1180 = smul.addr %s1179, 64
          %s1181 = scalar_lea.vmem [#allocation7], %s1180
          %1182 = dma.done %s1178, 1024
        $region48: #{tpu_custom_call.1} parent=43 // pred_fallthru
          _
      $region44: #{tpu_custom_call.1} parent=5 // pred_fallthru
        _
    $region6: #{tpu_custom_call.1} parent=1 // loop_footer
      %s19 = sadd.s32 1, %s15
    $region7: #{tpu_custom_call.1} parent=1 // loop_footer_branch
      %14 = sbr.rel target = $region3
    $region8: #{tpu_custom_call.1} parent=1 // loop_exit
      _
    %1183 = vsyncpa [#allocation3], 1
    %s1184 = scalar_lea.sflag [#allocation3], 1
    %1185 = vsyncpa %s1184, 1
    %1186 = vsyncpa [#allocation6], 1
    %1187 = vsyncpa [#allocation4], 1
    %s1188 = scalar_lea.sflag [#allocation4], 1
    %1189 = vsyncpa %s1188, 1

</llo_original>
